<compile_context>
chip_gen: v7x
topology: tpu7x:2x2x1
jax: 0.10.0
libtpu: 0.0.40
codegen_flags: <defaults>
</compile_context>

<pallas_src>
import functools

import jax
import jax.numpy as jnp
from jax.experimental import pallas as pl
from jax.experimental.pallas import tpu as pltpu


def _round_up(n, m):
    return ((n + m - 1) // m) * m


# --------------------------------------------------------------------------
# Pallas kernel: MLP over the gathered ball features for one (bblk, tm) tile.
# --------------------------------------------------------------------------
def _descriptor_kernel(x_ref,
                       w1_ref, b1_ref,
                       w2_ref, b2_ref,
                       w3_ref, b3_ref,
                       w4a_ref, w4b_ref, b4_ref,
                       w5_ref, b5_ref,
                       out_ref,
                       *, bblk, tm, K, D, cin, act_dtype):
    R = bblk * tm            # keypoint rows in this step
    rows = K * R             # total gathered samples; K is the SLOW row axis

    # (K, bblk, tm, cin) block -> (rows, cin): leading-dim merge only.
    x = x_ref[...].reshape(rows, cin)

    def dense_relu(h, w_ref, b_ref):
        # bf16 x bf16 on the MXU, f32 accumulation; bias+ReLU(+downcast) fused.
        acc = jnp.dot(h.astype(jnp.bfloat16), w_ref[...],
                      preferred_element_type=jnp.float32)
        return jnp.maximum(acc + b_ref[...], 0.0).astype(act_dtype)

    # conv1 / conv2 / conv3 (1x1 conv == channel matmul), eval-BN folded, ReLU
    h = dense_relu(x, w1_ref, b1_ref)                       # (rows, D/4)
    h = dense_relu(h, w2_ref, b2_ref)                       # (rows, D/2)
    y1 = dense_relu(h, w3_ref, b3_ref)                      # (rows, D)

    # max over the K in-ball samples: K is the leading axis -> pure VPU slab max
    y_max = jnp.max(y1.reshape(K, R, D), axis=0)            # (R, D)

    # conv4 with split weight:  relu(cat(y1, bcast_K(y_max)) @ w4 + b4)
    #   == relu(y1 @ w4a + bcast_K(y_max @ w4b + b4))
    t_full = jnp.dot(y1.astype(jnp.bfloat16), w4a_ref[...],
                     preferred_element_type=jnp.float32)    # (rows, D)
    t_max = jnp.dot(y_max.astype(jnp.bfloat16), w4b_ref[...],
                    preferred_element_type=jnp.float32) + b4_ref[...]   # (R, D)
    h4 = jnp.maximum(t_full.reshape(K, R, D) + t_max[None], 0.0)

    # conv5 (no norm / activation).  Its bias is constant over K, so it is
    # added after the max (mathematically identical, K-fold fewer adds).
    y2 = jnp.dot(h4.reshape(rows, D).astype(jnp.bfloat16), w5_ref[...],
                 preferred_element_type=jnp.float32)        # (rows, D)
    desc = jnp.max(y2.reshape(K, R, D), axis=0) + b5_ref[...]   # (R, D)

    # L2-normalize over channels (exact divide; tiny row count).
    nrm = jnp.sqrt(jnp.sum(desc * desc, axis=-1, keepdims=True))
    desc = desc / (nrm + 1e-5)

    out_ref[...] = desc.reshape(bblk, tm, D).astype(out_ref.dtype)


# --------------------------------------------------------------------------
# Hardware-aware configuration.
# --------------------------------------------------------------------------
def _device_info():
    kind = ""
    try:
        kind = jax.devices()[0].device_kind.lower()
    except Exception:
        pass
    is_v5e = ("v5 lite" in kind) or ("v5e" in kind) or ("v5litepod" in kind)
    is_v7 = "v7" in kind
    vmem_cap = None
    try:
        vmem_cap = int(pltpu.get_tpu_info().vmem_capacity_bytes)
    except Exception:
        vmem_cap = None
    if vmem_cap is None:
        vmem_cap = 64 * 1024 * 1024 if is_v7 else 128 * 1024 * 1024
    return is_v5e, is_v7, vmem_cap


def _choose_tiling(B, M, K, D, *, rows_cap, target_rows=4096, min_steps=1):
    """Pick (bblk, tm) = batches / keypoints per grid step.

    Constraints: tm divides M and is a multiple of 8 (or == M) so the input
    block (K, bblk, tm, cin) and output block (bblk, tm, D) are layout-legal
    and all in-kernel reshapes are pure leading-dim merges."""
    tms = [t for t in range(1, M + 1)
           if M % t == 0 and (t % 8 == 0 or t == M)]
    bbs = [b for b in range(1, B + 1) if B % b == 0]
    pairs = [(b, t) for b in bbs for t in tms]
    feasible = [p for p in pairs if p[0] * p[1] * K <= rows_cap]
    if not feasible:
        # Even the smallest legal tile exceeds the VMEM row cap (huge M*K);
        # TODO(synk): would need to also split the K axis across grid steps.
        feasible = [(1, min(tms))]

    def score(p):
        b, t = p
        rows = b * t * K
        steps = (B // b) * (M // t)
        meets = 1 if steps >= min_steps else 0
        if rows >= target_rows:
            # smallest tile that still reaches the row target (don't waste VMEM)
            return (meets, 1, -rows, t)
        return (meets, 0, rows, t)

    return max(feasible, key=score)


def descriptor_pallas(x_kbmc_bf16, params, *, M, K, D, bblk=None, tm=None,
                      vmem_limit_bytes=None):
    """x_kbmc_bf16: (K, B, M, Cin_padded) gathered+centered ball features."""
    Kk, B, Mk, cin = x_kbmc_bf16.shape
    assert Kk == K and Mk == M

    is_v5e, is_v7, vmem_cap = _device_info()
    if vmem_limit_bytes is None:
        # 48 MiB on 128-MiB parts (v5e/v6e), capped at half of VMEM on v7x.
        vmem_limit_bytes = min(48 * 1024 * 1024,
                               max(16 * 1024 * 1024, vmem_cap // 2))
    act_dtype = jnp.float32 if is_v5e else jnp.bfloat16   # bf16 VPU on v6e/v7x
    min_steps = 2 if is_v7 else 1                         # keep both v7x TCs busy

    # rows-per-step cap from a generous per-row VMEM estimate
    lane_w = max(D, 128)
    bytes_per_row = 2 * 2 * 128 + 6 * lane_w * 4          # dbuf input + live acts
    vmem_budget = vmem_limit_bytes // 2                    # headroom for scratch
    rows_cap = max(K, vmem_budget // bytes_per_row)

    auto_b, auto_m = _choose_tiling(B, M, K, D, rows_cap=rows_cap,
                                    target_rows=4096, min_steps=min_steps)
    bblk = auto_b if bblk is None else bblk
    tm = auto_m if tm is None else tm
    assert B % bblk == 0 and M % tm == 0

    (w1, b1), (w2, b2), (w3, b3), (w4a, w4b, b4), (w5, b5) = params
    weights = [w1, b1, w2, b2, w3, b3, w4a, w4b, b4, w5, b5]

    def full(arr):
        nd = arr.ndim
        return pl.BlockSpec(arr.shape, lambda b, m, _nd=nd: (0,) * _nd)

    kernel = functools.partial(_descriptor_kernel, bblk=bblk, tm=tm, K=K, D=D,
                               cin=cin, act_dtype=act_dtype)

    # advisory cost estimate so XLA overlaps the surrounding glue with the kernel
    c1, c2 = D // 4, D // 2
    per_sample = 2 * (cin * c1 + c1 * c2 + c2 * D + 2 * D * D)
    flops = B * M * K * per_sample + 2 * B * M * D * D
    bytes_accessed = (int(x_kbmc_bf16.size) * 2
                      + sum(int(a.size) * a.dtype.itemsize for a in weights)
                      + B * M * D * 4)
    cost = pl.CostEstimate(flops=int(flops), transcendentals=int(B * M),
                           bytes_accessed=int(bytes_accessed))

    out = pl.pallas_call(
        kernel,
        out_shape=jax.ShapeDtypeStruct((B, M, D), jnp.float32),
        grid_spec=pltpu.PrefetchScalarGridSpec(
            num_scalar_prefetch=0,
            grid=(B // bblk, M // tm),
            in_specs=[pl.BlockSpec((K, bblk, tm, cin),
                                   lambda b, m: (0, b, m, 0))]
                     + [full(a) for a in weights],
            out_specs=pl.BlockSpec((bblk, tm, D), lambda b, m: (b, m, 0)),
        ),
        compiler_params=pltpu.CompilerParams(
            dimension_semantics=("parallel", "parallel"),
            vmem_limit_bytes=int(vmem_limit_bytes)),
        cost_estimate=cost,
    )(x_kbmc_bf16, *weights)
    return out                                            # (B, M, D)


# --------------------------------------------------------------------------
# Glue: ball query emulation, gather, centering, parameter construction.
# --------------------------------------------------------------------------
def ball_query_jax(dist, radius, K):
    """Emulates ball_query.forward_cuda_shared_mem: for each (b, m) take the
    first K point indices with dist < radius; if fewer than K are found, fill
    the remaining slots with the first in-ball index (0 if none)."""
    # TODO(synk): exact tie/fill semantics of the custom CUDA kernel are not
    # documented; this follows the standard PointNet++ ball-query behaviour.
    B, Mk, N = dist.shape
    in_ball = dist < radius
    arange_n = jnp.arange(N)
    sort_key = jnp.where(in_ball, arange_n[None, None, :], N)
    order = jnp.argsort(sort_key, axis=-1)                 # in-ball indices first
    cnt = jnp.sum(in_ball, axis=-1)                        # (B, M)
    first = jnp.where(cnt > 0, order[..., 0], 0)           # (B, M)
    idx_k = order[..., :K]                                 # (B, M, K)
    pos = jnp.arange(K)[None, None, :]
    idx = jnp.where(pos < cnt[..., None], idx_k, first[..., None])
    idx = jnp.where(cnt[..., None] > 0, idx, 0)
    return idx                                             # (B, M, K)


def fold_bn(w, b, gamma, beta, mean, var, eps=1e-5):
    """Fold eval-mode BatchNorm into the preceding 1x1 conv (exact in eval)."""
    scale = gamma / jnp.sqrt(var + eps)
    return w * scale[None, :], (b - mean) * scale + beta


def make_params(key, in_channels, D):
    """Deterministic synthetic parameters (conv weight/bias + folded BN).

    Weights are stored bf16 (MXU-native); biases stay f32.  conv1's input rows
    are zero-padded to the padded Cin, and conv4's weight is split into
    (w4a, w4b) so the kernel never builds the channel concat."""
    layer_io = [(in_channels, D // 4), (D // 4, D // 2), (D // 2, D),
                (2 * D, D), (D, D)]
    raw = []
    for li, (cin, cout) in enumerate(layer_io):
        key, kw, kb, kg, kbe, km, kv = jax.random.split(key, 7)
        w = jax.random.normal(kw, (cin, cout), jnp.float32) / jnp.sqrt(cin)
        b = 0.1 * jax.random.normal(kb, (1, cout), jnp.float32)
        if li < 4:  # conv1..conv4 have BN (eval mode) + ReLU; conv5 is plain
            gamma = 1.0 + 0.1 * jax.random.uniform(kg, (cout,), jnp.float32)
            beta = 0.05 * jax.random.normal(kbe, (cout,), jnp.float32)
            mean = 0.05 * jax.random.normal(km, (cout,), jnp.float32)
            var = 1.0 + 0.1 * jnp.abs(jax.random.normal(kv, (cout,), jnp.float32))
            w, b = fold_bn(w, b, gamma, beta, mean, var)
        raw.append((w, b))
    (w1, b1), (w2, b2), (w3, b3), (w4, b4), (w5, b5) = raw

    cin_pad = _round_up(max(in_channels, 8), 8)
    if cin_pad > in_channels:
        w1 = jnp.concatenate(
            [w1, jnp.zeros((cin_pad - in_channels, w1.shape[1]), w1.dtype)], axis=0)
    w4a, w4b = w4[:D], w4[D:]

    bf = lambda w: w.astype(jnp.bfloat16)
    return [(bf(w1), b1), (bf(w2), b2), (bf(w3), b3),
            (bf(w4a), bf(w4b), b4), (bf(w5), b5)]


def _pad_last_dim(x, target):
    pad = target - x.shape[-1]
    if pad <= 0:
        return x
    cfg = [(0, 0)] * (x.ndim - 1) + [(0, pad)]
    return jnp.pad(x, cfg)


def descriptor_lite_old_forward(x, sn, keypoints, params, *,
                                ball_radius, K, D, perm_key):
    """x: (B,3,N)  sn: (B,snl,N)  keypoints: (B,3,M) -> (descriptor (B,D,M),
    x_features (B, 3+snl, M, K)), matching the PyTorch module."""
    B, _, N = x.shape
    M = keypoints.shape[2]

    # random permutation of the points (deterministic here)
    permute_idx = jax.random.permutation(perm_key, N)
    x = x[:, :, permute_idx]
    sn = sn[:, :, permute_idx]
    x_aug = jnp.concatenate([x, sn], axis=1)               # (B, 3+snl, N)
    cin = x_aug.shape[1]

    # node-to-point L2 distance: (B, M, N)
    node_exp = keypoints[:, :, :, None]                    # (B, 3, M, 1)
    pc_exp = x[:, :, None, :]                              # (B, 3, 1, N)
    dist = jnp.sqrt(jnp.sum((node_exp - pc_exp) ** 2, axis=1))

    # ball query -> (B, M, K) indices into the (permuted) point dimension
    idx = ball_query_jax(dist, ball_radius, K)

    # gather x_aug along N (explicit expand, mirroring torch.gather)
    idx_exp = jnp.broadcast_to(idx[:, None, :, :], (B, cin, M, K)).reshape(B, cin, M * K)
    x_aug_ball = jnp.take_along_axis(x_aug, idx_exp, axis=2).reshape(B, cin, M, K)
    # center xyz channels on the keypoint
    xyz_centered = x_aug_ball[:, 0:3] - keypoints[:, :, :, None]
    x_features = jnp.concatenate([xyz_centered, x_aug_ball[:, 3:]], axis=1)

    # kernel input: K slow, channels minor, zero-padded Cin, bf16
    cin_pad = _round_up(max(cin, 8), 8)
    x_kbmc = jnp.transpose(x_features, (3, 0, 2, 1))        # (K, B, M, Cin)
    x_kbmc = _pad_last_dim(x_kbmc, cin_pad).astype(jnp.bfloat16)

    desc_bmd = descriptor_pallas(x_kbmc, params, M=M, K=K, D=D)  # (B, M, D)
    descriptor = jnp.transpose(desc_bmd, (0, 2, 1))              # (B, D, M)
    return descriptor, x_features


# --------------------------------------------------------------------------
# Pure-JAX reference (same bf16 weights, f32 math) for a sanity check.
# --------------------------------------------------------------------------
def descriptor_reference(x_kbmc, params, *, D):
    layers = [tuple(jnp.asarray(t, jnp.float32) for t in layer) for layer in params]
    (w1, b1), (w2, b2), (w3, b3), (w4a, w4b, b4), (w5, b5) = layers
    relu = lambda t: jnp.maximum(t, 0.0)
    x = x_kbmc.astype(jnp.float32)                          # (K, B, M, C)
    h = relu(x @ w1 + b1)
    h = relu(h @ w2 + b2)
    y1 = relu(h @ w3 + b3)                                  # (K, B, M, D)
    ymax = jnp.max(y1, axis=0)                              # (B, M, D)
    h4 = relu(y1 @ w4a + (ymax @ w4b + b4)[None])
    y2 = h4 @ w5
    desc = jnp.max(y2, axis=0) + b5                         # (B, M, D)
    nrm = jnp.linalg.norm(desc, axis=-1, keepdims=True)
    return desc / (nrm + 1e-5)


# --------------------------------------------------------------------------
if __name__ == "__main__":
    # small, module-consistent shapes
    B, N, M, K = 2, 64, 8, 16
    surface_normal_len = 3
    descriptor_len = 64           # opt.descriptor_len
    ball_radius = 0.8             # opt.ball_radius
    in_channels = 3 + surface_normal_len

    key = jax.random.PRNGKey(0)
    kx, ksn, kperm, kparams = jax.random.split(key, 4)

    x = jax.random.uniform(kx, (B, 3, N), jnp.float32, minval=-1.0, maxval=1.0)
    sn_raw = jax.random.normal(ksn, (B, surface_normal_len, N), jnp.float32)
    sn = sn_raw / (jnp.linalg.norm(sn_raw, axis=1, keepdims=True) + 1e-8)
    # pick keypoints as a subset of the points so every ball is non-empty
    keypoints = x[:, :, :M]

    params = make_params(kparams, in_channels, descriptor_len)

    descriptor, x_features = descriptor_lite_old_forward(
        x, sn, keypoints, params,
        ball_radius=ball_radius, K=K, D=descriptor_len, perm_key=kperm)

    descriptor = jax.block_until_ready(descriptor)
    x_features = jax.block_until_ready(x_features)

    assert descriptor.shape == (B, descriptor_len, M)
    assert x_features.shape == (B, in_channels, M, K)
    assert bool(jnp.all(jnp.isfinite(descriptor)))
    # descriptors are L2-normalized over channels (up to the +1e-5 in the denom)
    norms = jnp.linalg.norm(descriptor, axis=1)
    assert bool(jnp.all(jnp.abs(norms - 1.0) < 1e-2))

    # compare against a pure-JAX f32 reference built on the same inputs/params
    cin_pad = _round_up(max(in_channels, 8), 8)
    x_kbmc = jnp.transpose(x_features, (3, 0, 2, 1))
    x_kbmc = _pad_last_dim(x_kbmc, cin_pad)
    ref_bmd = descriptor_reference(x_kbmc, params, D=descriptor_len)
    ref = jnp.transpose(ref_bmd, (0, 2, 1))                 # (B, D, M)
    max_diff = float(jnp.max(jnp.abs(descriptor - ref)))
    assert max_diff < 0.1, f"kernel vs reference max abs diff {max_diff}"

    print("KERNEL_OK")
</pallas_src>

<mosaic_0001>
module attributes {stable_mosaic.version = 11 : i64} {
  func.func @_descriptor_kernel(%arg0: i32, %arg1: i32, %arg2: memref<16x2x8x8xbf16, #tpu.memory_space<vmem>>, %arg3: memref<8x16xbf16, #tpu.memory_space<vmem>>, %arg4: memref<1x16xf32, #tpu.memory_space<vmem>>, %arg5: memref<16x32xbf16, #tpu.memory_space<vmem>>, %arg6: memref<1x32xf32, #tpu.memory_space<vmem>>, %arg7: memref<32x64xbf16, #tpu.memory_space<vmem>>, %arg8: memref<1x64xf32, #tpu.memory_space<vmem>>, %arg9: memref<64x64xbf16, #tpu.memory_space<vmem>>, %arg10: memref<64x64xbf16, #tpu.memory_space<vmem>>, %arg11: memref<1x64xf32, #tpu.memory_space<vmem>>, %arg12: memref<64x64xbf16, #tpu.memory_space<vmem>>, %arg13: memref<1x64xf32, #tpu.memory_space<vmem>>, %arg14: memref<2x8x64xf32, #tpu.memory_space<vmem>>) attributes {dimension_semantics = [#tpu.dimension_semantics<parallel>, #tpu.dimension_semantics<parallel>], iteration_bounds = array<i64: 1, 1>, scalar_prefetch = 0 : i64, scratch_operands = 0 : i64, tpu.core_type = #tpu.core_type<tc>, window_params = [{transform_indices = @transform_0, window_bounds = array<i64: 16, 2, 8, 8>}, {pipeline_mode = #tpu.pipeline_mode<synchronous>, transform_indices = @transform_1, window_bounds = array<i64: 8, 16>}, {pipeline_mode = #tpu.pipeline_mode<synchronous>, transform_indices = @transform_2, window_bounds = array<i64: 1, 16>}, {pipeline_mode = #tpu.pipeline_mode<synchronous>, transform_indices = @transform_3, window_bounds = array<i64: 16, 32>}, {pipeline_mode = #tpu.pipeline_mode<synchronous>, transform_indices = @transform_4, window_bounds = array<i64: 1, 32>}, {pipeline_mode = #tpu.pipeline_mode<synchronous>, transform_indices = @transform_5, window_bounds = array<i64: 32, 64>}, {pipeline_mode = #tpu.pipeline_mode<synchronous>, transform_indices = @transform_6, window_bounds = array<i64: 1, 64>}, {pipeline_mode = #tpu.pipeline_mode<synchronous>, transform_indices = @transform_7, window_bounds = array<i64: 64, 64>}, {pipeline_mode = #tpu.pipeline_mode<synchronous>, transform_indices = @transform_8, window_bounds = array<i64: 64, 64>}, {pipeline_mode = #tpu.pipeline_mode<synchronous>, transform_indices = @transform_9, window_bounds = array<i64: 1, 64>}, {pipeline_mode = #tpu.pipeline_mode<synchronous>, transform_indices = @transform_10, window_bounds = array<i64: 64, 64>}, {pipeline_mode = #tpu.pipeline_mode<synchronous>, transform_indices = @transform_11, window_bounds = array<i64: 1, 64>}, {transform_indices = @transform_12, window_bounds = array<i64: 2, 8, 64>}]} {
    %c0 = arith.constant 0 : index
    %c0_0 = arith.constant 0 : index
    %c0_1 = arith.constant 0 : index
    %c0_2 = arith.constant 0 : index
    %0 = vector.load %arg2[%c0, %c0_0, %c0_1, %c0_2] : memref<16x2x8x8xbf16, #tpu.memory_space<vmem>>, vector<16x2x8x8xbf16>
    %1 = vector.shape_cast %0 : vector<16x2x8x8xbf16> to vector<256x8xbf16>
    %c0_3 = arith.constant 0 : index
    %c0_4 = arith.constant 0 : index
    %2 = vector.load %arg3[%c0_3, %c0_4] : memref<8x16xbf16, #tpu.memory_space<vmem>>, vector<8x16xbf16>
    %cst = arith.constant dense<0.000000e+00> : vector<256x16xf32>
    %3 = tpu.matmul %1, %2, %cst {dimension_numbers = #tpu.dot_dimension_numbers<[1], [0], [0], [1], [0, 0, 1, 1], [], []>} : vector<256x8xbf16>, vector<8x16xbf16>, vector<256x16xf32> -> vector<256x16xf32>
    %c0_5 = arith.constant 0 : index
    %c0_6 = arith.constant 0 : index
    %4 = vector.load %arg4[%c0_5, %c0_6] : memref<1x16xf32, #tpu.memory_space<vmem>>, vector<1x16xf32>
    %5 = vector.broadcast %4 : vector<1x16xf32> to vector<256x16xf32>
    %6 = arith.addf %3, %5 : vector<256x16xf32>
    %cst_7 = arith.constant 0.000000e+00 : f32
    %7 = vector.broadcast %cst_7 : f32 to vector<256x16xf32>
    %8 = arith.maximumf %6, %7 : vector<256x16xf32>
    %9 = arith.truncf %8 : vector<256x16xf32> to vector<256x16xbf16>
    %c0_8 = arith.constant 0 : index
    %c0_9 = arith.constant 0 : index
    %10 = vector.load %arg5[%c0_8, %c0_9] : memref<16x32xbf16, #tpu.memory_space<vmem>>, vector<16x32xbf16>
    %cst_10 = arith.constant dense<0.000000e+00> : vector<256x32xf32>
    %11 = tpu.matmul %9, %10, %cst_10 {dimension_numbers = #tpu.dot_dimension_numbers<[1], [0], [0], [1], [0, 0, 1, 1], [], []>} : vector<256x16xbf16>, vector<16x32xbf16>, vector<256x32xf32> -> vector<256x32xf32>
    %c0_11 = arith.constant 0 : index
    %c0_12 = arith.constant 0 : index
    %12 = vector.load %arg6[%c0_11, %c0_12] : memref<1x32xf32, #tpu.memory_space<vmem>>, vector<1x32xf32>
    %13 = vector.broadcast %12 : vector<1x32xf32> to vector<256x32xf32>
    %14 = arith.addf %11, %13 : vector<256x32xf32>
    %cst_13 = arith.constant 0.000000e+00 : f32
    %15 = vector.broadcast %cst_13 : f32 to vector<256x32xf32>
    %16 = arith.maximumf %14, %15 : vector<256x32xf32>
    %17 = arith.truncf %16 : vector<256x32xf32> to vector<256x32xbf16>
    %c0_14 = arith.constant 0 : index
    %c0_15 = arith.constant 0 : index
    %18 = vector.load %arg7[%c0_14, %c0_15] : memref<32x64xbf16, #tpu.memory_space<vmem>>, vector<32x64xbf16>
    %cst_16 = arith.constant dense<0.000000e+00> : vector<256x64xf32>
    %19 = tpu.matmul %17, %18, %cst_16 {dimension_numbers = #tpu.dot_dimension_numbers<[1], [0], [0], [1], [0, 0, 1, 1], [], []>} : vector<256x32xbf16>, vector<32x64xbf16>, vector<256x64xf32> -> vector<256x64xf32>
    %c0_17 = arith.constant 0 : index
    %c0_18 = arith.constant 0 : index
    %20 = vector.load %arg8[%c0_17, %c0_18] : memref<1x64xf32, #tpu.memory_space<vmem>>, vector<1x64xf32>
    %21 = vector.broadcast %20 : vector<1x64xf32> to vector<256x64xf32>
    %22 = arith.addf %19, %21 : vector<256x64xf32>
    %cst_19 = arith.constant 0.000000e+00 : f32
    %23 = vector.broadcast %cst_19 : f32 to vector<256x64xf32>
    %24 = arith.maximumf %22, %23 : vector<256x64xf32>
    %25 = arith.truncf %24 : vector<256x64xf32> to vector<256x64xbf16>
    %26 = vector.shape_cast %25 : vector<256x64xbf16> to vector<16x16x64xbf16>
    %cst_20 = arith.constant dense<0xFF80> : vector<16x64xbf16>
    %27 = vector.multi_reduction <maximumf>, %26, %cst_20 [0] : vector<16x16x64xbf16> to vector<16x64xbf16>
    %c0_21 = arith.constant 0 : index
    %c0_22 = arith.constant 0 : index
    %28 = vector.load %arg9[%c0_21, %c0_22] : memref<64x64xbf16, #tpu.memory_space<vmem>>, vector<64x64xbf16>
    %cst_23 = arith.constant dense<0.000000e+00> : vector<256x64xf32>
    %29 = tpu.matmul %25, %28, %cst_23 {dimension_numbers = #tpu.dot_dimension_numbers<[1], [0], [0], [1], [0, 0, 1, 1], [], []>} : vector<256x64xbf16>, vector<64x64xbf16>, vector<256x64xf32> -> vector<256x64xf32>
    %c0_24 = arith.constant 0 : index
    %c0_25 = arith.constant 0 : index
    %30 = vector.load %arg10[%c0_24, %c0_25] : memref<64x64xbf16, #tpu.memory_space<vmem>>, vector<64x64xbf16>
    %cst_26 = arith.constant dense<0.000000e+00> : vector<16x64xf32>
    %31 = tpu.matmul %27, %30, %cst_26 {dimension_numbers = #tpu.dot_dimension_numbers<[1], [0], [0], [1], [0, 0, 1, 1], [], []>} : vector<16x64xbf16>, vector<64x64xbf16>, vector<16x64xf32> -> vector<16x64xf32>
    %c0_27 = arith.constant 0 : index
    %c0_28 = arith.constant 0 : index
    %32 = vector.load %arg11[%c0_27, %c0_28] : memref<1x64xf32, #tpu.memory_space<vmem>>, vector<1x64xf32>
    %33 = vector.broadcast %32 : vector<1x64xf32> to vector<16x64xf32>
    %34 = arith.addf %31, %33 : vector<16x64xf32>
    %35 = vector.shape_cast %29 : vector<256x64xf32> to vector<16x16x64xf32>
    %36 = vector.shape_cast %34 : vector<16x64xf32> to vector<1x16x64xf32>
    %37 = vector.broadcast %36 : vector<1x16x64xf32> to vector<16x16x64xf32>
    %38 = arith.addf %35, %37 : vector<16x16x64xf32>
    %cst_29 = arith.constant 0.000000e+00 : f32
    %39 = vector.broadcast %cst_29 : f32 to vector<16x16x64xf32>
    %40 = arith.maximumf %38, %39 : vector<16x16x64xf32>
    %41 = vector.shape_cast %40 : vector<16x16x64xf32> to vector<256x64xf32>
    %42 = arith.truncf %41 : vector<256x64xf32> to vector<256x64xbf16>
    %c0_30 = arith.constant 0 : index
    %c0_31 = arith.constant 0 : index
    %43 = vector.load %arg12[%c0_30, %c0_31] : memref<64x64xbf16, #tpu.memory_space<vmem>>, vector<64x64xbf16>
    %cst_32 = arith.constant dense<0.000000e+00> : vector<256x64xf32>
    %44 = tpu.matmul %42, %43, %cst_32 {dimension_numbers = #tpu.dot_dimension_numbers<[1], [0], [0], [1], [0, 0, 1, 1], [], []>} : vector<256x64xbf16>, vector<64x64xbf16>, vector<256x64xf32> -> vector<256x64xf32>
    %45 = vector.shape_cast %44 : vector<256x64xf32> to vector<16x16x64xf32>
    %cst_33 = arith.constant dense<0xFF800000> : vector<16x64xf32>
    %46 = vector.multi_reduction <maximumf>, %45, %cst_33 [0] : vector<16x16x64xf32> to vector<16x64xf32>
    %c0_34 = arith.constant 0 : index
    %c0_35 = arith.constant 0 : index
    %47 = vector.load %arg13[%c0_34, %c0_35] : memref<1x64xf32, #tpu.memory_space<vmem>>, vector<1x64xf32>
    %48 = vector.broadcast %47 : vector<1x64xf32> to vector<16x64xf32>
    %49 = arith.addf %46, %48 : vector<16x64xf32>
    %50 = arith.mulf %49, %49 : vector<16x64xf32>
    %cst_36 = arith.constant dense<0.000000e+00> : vector<16xf32>
    %51 = vector.multi_reduction <add>, %50, %cst_36 [1] : vector<16x64xf32> to vector<16xf32>
    %52 = vector.shape_cast %51 : vector<16xf32> to vector<16x1xf32>
    %53 = math.sqrt %52 : vector<16x1xf32>
    %cst_37 = arith.constant 9.99999974E-6 : f32
    %54 = vector.broadcast %cst_37 : f32 to vector<16x1xf32>
    %55 = arith.addf %53, %54 : vector<16x1xf32>
    %56 = vector.broadcast %55 : vector<16x1xf32> to vector<16x64xf32>
    %57 = arith.divf %49, %56 : vector<16x64xf32>
    %58 = vector.shape_cast %57 : vector<16x64xf32> to vector<2x8x64xf32>
    %c0_38 = arith.constant 0 : index
    %c0_39 = arith.constant 0 : index
    %c0_40 = arith.constant 0 : index
    %59 = vector.load %arg14[%c0_38, %c0_39, %c0_40] : memref<2x8x64xf32, #tpu.memory_space<vmem>>, vector<2x8x64xf32>
    tpu.vector_store %arg14[%c0_38, %c0_39, %c0_40], %58 {strides = array<i32>} : memref<2x8x64xf32, #tpu.memory_space<vmem>>, vector<2x8x64xf32>,
    return
  }
  func.func @transform_0(%arg0: i32, %arg1: i32) -> (i32, i32, i32, i32) {
    %c0_i32 = arith.constant 0 : i32
    %c0_i32_0 = arith.constant 0 : i32
    %c0_i32_1 = arith.constant 0 : i32
    return %c0_i32, %arg0, %arg1, %c0_i32_0 : i32, i32, i32, i32
  }
  func.func @transform_1(%arg0: i32, %arg1: i32) -> (i32, i32) {
    %c0_i32 = arith.constant 0 : i32
    %c0_i32_0 = arith.constant 0 : i32
    %c0_i32_1 = arith.constant 0 : i32
    return %c0_i32, %c0_i32_0 : i32, i32
  }
  func.func @transform_2(%arg0: i32, %arg1: i32) -> (i32, i32) {
    %c0_i32 = arith.constant 0 : i32
    %c0_i32_0 = arith.constant 0 : i32
    %c0_i32_1 = arith.constant 0 : i32
    return %c0_i32, %c0_i32_0 : i32, i32
  }
  func.func @transform_3(%arg0: i32, %arg1: i32) -> (i32, i32) {
    %c0_i32 = arith.constant 0 : i32
    %c0_i32_0 = arith.constant 0 : i32
    %c0_i32_1 = arith.constant 0 : i32
    return %c0_i32, %c0_i32_0 : i32, i32
  }
  func.func @transform_4(%arg0: i32, %arg1: i32) -> (i32, i32) {
    %c0_i32 = arith.constant 0 : i32
    %c0_i32_0 = arith.constant 0 : i32
    %c0_i32_1 = arith.constant 0 : i32
    return %c0_i32, %c0_i32_0 : i32, i32
  }
  func.func @transform_5(%arg0: i32, %arg1: i32) -> (i32, i32) {
    %c0_i32 = arith.constant 0 : i32
    %c0_i32_0 = arith.constant 0 : i32
    %c0_i32_1 = arith.constant 0 : i32
    return %c0_i32, %c0_i32_0 : i32, i32
  }
  func.func @transform_6(%arg0: i32, %arg1: i32) -> (i32, i32) {
    %c0_i32 = arith.constant 0 : i32
    %c0_i32_0 = arith.constant 0 : i32
    %c0_i32_1 = arith.constant 0 : i32
    return %c0_i32, %c0_i32_0 : i32, i32
  }
  func.func @transform_7(%arg0: i32, %arg1: i32) -> (i32, i32) {
    %c0_i32 = arith.constant 0 : i32
    %c0_i32_0 = arith.constant 0 : i32
    %c0_i32_1 = arith.constant 0 : i32
    return %c0_i32, %c0_i32_0 : i32, i32
  }
  func.func @transform_8(%arg0: i32, %arg1: i32) -> (i32, i32) {
    %c0_i32 = arith.constant 0 : i32
    %c0_i32_0 = arith.constant 0 : i32
    %c0_i32_1 = arith.constant 0 : i32
    return %c0_i32, %c0_i32_0 : i32, i32
  }
  func.func @transform_9(%arg0: i32, %arg1: i32) -> (i32, i32) {
    %c0_i32 = arith.constant 0 : i32
    %c0_i32_0 = arith.constant 0 : i32
    %c0_i32_1 = arith.constant 0 : i32
    return %c0_i32, %c0_i32_0 : i32, i32
  }
  func.func @transform_10(%arg0: i32, %arg1: i32) -> (i32, i32) {
    %c0_i32 = arith.constant 0 : i32
    %c0_i32_0 = arith.constant 0 : i32
    %c0_i32_1 = arith.constant 0 : i32
    return %c0_i32, %c0_i32_0 : i32, i32
  }
  func.func @transform_11(%arg0: i32, %arg1: i32) -> (i32, i32) {
    %c0_i32 = arith.constant 0 : i32
    %c0_i32_0 = arith.constant 0 : i32
    %c0_i32_1 = arith.constant 0 : i32
    return %c0_i32, %c0_i32_0 : i32, i32
  }
  func.func @transform_12(%arg0: i32, %arg1: i32) -> (i32, i32, i32) {
    %c0_i32 = arith.constant 0 : i32
    %c0_i32_0 = arith.constant 0 : i32
    return %arg0, %arg1, %c0_i32 : i32, i32, i32
  }
}

</mosaic_0001>

<llo_original>
// kernel: tpu_custom_call.1
$region0: #{tpu_custom_call.1}
  #allocation0 [shape = 'u32[]', space=smem, size = 0x4, offset = 0x4, fixed_abs, tag = 'smem constant byte address 0x4 - core index']
  #allocation1 [shape = 'u32[144,128]{1,0:T(1,128)}', space=vmem, size = 0x12000, scoped, tag = 'internal scratch']
  %s0 = inlined_call_operand.vmem [shape: bf16[16,2,8,8], index: 0, kind: input, shape index: {}]
  %s1 = inlined_call_operand.vmem [shape: bf16[8,16], index: 1, kind: input, shape index: {}]
  %s2 = inlined_call_operand.vmem [shape: f32[1,16], index: 2, kind: input, shape index: {}]
  %s3 = inlined_call_operand.vmem [shape: bf16[16,32], index: 3, kind: input, shape index: {}]
  %s4 = inlined_call_operand.vmem [shape: f32[1,32], index: 4, kind: input, shape index: {}]
  %s5 = inlined_call_operand.vmem [shape: bf16[32,64], index: 5, kind: input, shape index: {}]
  %s6 = inlined_call_operand.vmem [shape: f32[1,64], index: 6, kind: input, shape index: {}]
  %s7 = inlined_call_operand.vmem [shape: bf16[64,64], index: 7, kind: input, shape index: {}]
  %s8 = inlined_call_operand.vmem [shape: bf16[64,64], index: 8, kind: input, shape index: {}]
  %s9 = inlined_call_operand.vmem [shape: f32[1,64], index: 9, kind: input, shape index: {}]
  %s10 = inlined_call_operand.vmem [shape: bf16[64,64], index: 10, kind: input, shape index: {}]
  %s11 = inlined_call_operand.vmem [shape: f32[1,64], index: 11, kind: input, shape index: {}]
  %s12 = inlined_call_operand.hbm [shape: f32[2,8,64], index: 12, kind: output, shape index: {}]
  %s13 = sld [smem:[#allocation0]]
  $region58: #{tpu_custom_call.1} parent=0
    _
  %s15 = ssub.s32 1, %s13
  %s16 = scalar_select 0, %s15, %s13
  $region1: #{tpu_custom_call.1} parent=0
    #allocation2 [shape = 'u8[8192]{0}', space=vmem, size = 0x2000, scoped, tag = 'output window, operand 0, single buffered']
    #allocation3 [shape = 's32[1]{0}', space=sflag, size = 0x4, scoped, tag = 'scoped memory for tpu_custom_call.1']
    %17 = vsyncpa [#allocation3], 0
    // Predicated region
    $region2: #{tpu_custom_call.1} parent=1 // pred_check
      _
    $region3: #{tpu_custom_call.1} parent=1 // pred_check_branch
      %19 = sbr.rel (0) target = $region5
    $region4: #{tpu_custom_call.1} parent=1 // pred_region
      _
    $region5: #{tpu_custom_call.1} parent=1 // pred_fallthru
      _
    // Predicated region
    $region6: #{tpu_custom_call.1} parent=1 // pred_check
      _
    $region7: #{tpu_custom_call.1} parent=1 // pred_check_branch
      %21 = sbr.rel (0) target = $region9
    $region8: #{tpu_custom_call.1} parent=1 // pred_region
      _
    $region9: #{tpu_custom_call.1} parent=1 // pred_fallthru
      _
    // Predicated region
    $region10: #{tpu_custom_call.1} parent=1 // pred_check
      _
    $region11: #{tpu_custom_call.1} parent=1 // pred_check_branch
      %23 = sbr.rel (0) target = $region13
    $region12: #{tpu_custom_call.1} parent=1 // pred_region
      _
    $region13: #{tpu_custom_call.1} parent=1 // pred_fallthru
      _
    // Predicated region
    $region14: #{tpu_custom_call.1} parent=1 // pred_check
      _
    $region15: #{tpu_custom_call.1} parent=1 // pred_check_branch
      %25 = sbr.rel (0) target = $region17
    $region16: #{tpu_custom_call.1} parent=1 // pred_region
      _
    $region17: #{tpu_custom_call.1} parent=1 // pred_fallthru
      _
    // Predicated region
    $region18: #{tpu_custom_call.1} parent=1 // pred_check
      _
    $region19: #{tpu_custom_call.1} parent=1 // pred_check_branch
      %27 = sbr.rel (0) target = $region21
    $region20: #{tpu_custom_call.1} parent=1 // pred_region
      _
    $region21: #{tpu_custom_call.1} parent=1 // pred_fallthru
      _
    // Predicated region
    $region22: #{tpu_custom_call.1} parent=1 // pred_check
      _
    $region23: #{tpu_custom_call.1} parent=1 // pred_check_branch
      %29 = sbr.rel (0) target = $region25
    $region24: #{tpu_custom_call.1} parent=1 // pred_region
      _
    $region25: #{tpu_custom_call.1} parent=1 // pred_fallthru
      _
    // Predicated region
    $region26: #{tpu_custom_call.1} parent=1 // pred_check
      _
    $region27: #{tpu_custom_call.1} parent=1 // pred_check_branch
      %31 = sbr.rel (0) target = $region29
    $region28: #{tpu_custom_call.1} parent=1 // pred_region
      _
    $region29: #{tpu_custom_call.1} parent=1 // pred_fallthru
      _
    // Predicated region
    $region30: #{tpu_custom_call.1} parent=1 // pred_check
      _
    $region31: #{tpu_custom_call.1} parent=1 // pred_check_branch
      %33 = sbr.rel (0) target = $region33
    $region32: #{tpu_custom_call.1} parent=1 // pred_region
      _
    $region33: #{tpu_custom_call.1} parent=1 // pred_fallthru
      _
    // Predicated region
    $region34: #{tpu_custom_call.1} parent=1 // pred_check
      _
    $region35: #{tpu_custom_call.1} parent=1 // pred_check_branch
      %35 = sbr.rel (0) target = $region37
    $region36: #{tpu_custom_call.1} parent=1 // pred_region
      _
    $region37: #{tpu_custom_call.1} parent=1 // pred_fallthru
      _
    // Predicated region
    $region38: #{tpu_custom_call.1} parent=1 // pred_check
      _
    $region39: #{tpu_custom_call.1} parent=1 // pred_check_branch
      %37 = sbr.rel (0) target = $region41
    $region40: #{tpu_custom_call.1} parent=1 // pred_region
      _
    $region41: #{tpu_custom_call.1} parent=1 // pred_fallthru
      _
    // Predicated region
    $region42: #{tpu_custom_call.1} parent=1 // pred_check
      _
    $region43: #{tpu_custom_call.1} parent=1 // pred_check_branch
      %39 = sbr.rel (0) target = $region45
    $region44: #{tpu_custom_call.1} parent=1 // pred_region
      _
    $region45: #{tpu_custom_call.1} parent=1 // pred_fallthru
      _
    // Predicated region
    $region46: #{tpu_custom_call.1} parent=1 // pred_check
      _
    $region47: #{tpu_custom_call.1} parent=1 // pred_check_branch
      %41 = sbr.rel (0) target = $region49
    $region48: #{tpu_custom_call.1} parent=1 // pred_region
      _
    $region49: #{tpu_custom_call.1} parent=1 // pred_fallthru
      _
    %v44 = vld [vmem:[%s0] sm:$0xf]
    %v45 = vld [vmem:[%s0 + $0x4] sm:$0xf]
    %v46 = vld [vmem:[%s0 + $0x8] sm:$0xf]
    %v47 = vld [vmem:[%s0 + $0xc] sm:$0xf]
    %v48 = vld [vmem:[%s0 + $0x10] sm:$0xf]
    %v49 = vld [vmem:[%s0 + $0x14] sm:$0xf]
    %v50 = vld [vmem:[%s0 + $0x18] sm:$0xf]
    %v51 = vld [vmem:[%s0 + $0x1c] sm:$0xf]
    %v52 = vld [vmem:[%s0 + $0x20] sm:$0xf]
    %v53 = vld [vmem:[%s0 + $0x24] sm:$0xf]
    %v54 = vld [vmem:[%s0 + $0x28] sm:$0xf]
    %v55 = vld [vmem:[%s0 + $0x2c] sm:$0xf]
    %v56 = vld [vmem:[%s0 + $0x30] sm:$0xf]
    %v57 = vld [vmem:[%s0 + $0x34] sm:$0xf]
    %v58 = vld [vmem:[%s0 + $0x38] sm:$0xf]
    %v59 = vld [vmem:[%s0 + $0x3c] sm:$0xf]
    %v60 = vld [vmem:[%s0 + $0x40] sm:$0xf]
    %v61 = vld [vmem:[%s0 + $0x44] sm:$0xf]
    %v62 = vld [vmem:[%s0 + $0x48] sm:$0xf]
    %v63 = vld [vmem:[%s0 + $0x4c] sm:$0xf]
    %v64 = vld [vmem:[%s0 + $0x50] sm:$0xf]
    %v65 = vld [vmem:[%s0 + $0x54] sm:$0xf]
    %v66 = vld [vmem:[%s0 + $0x58] sm:$0xf]
    %v67 = vld [vmem:[%s0 + $0x5c] sm:$0xf]
    %v68 = vld [vmem:[%s0 + $0x60] sm:$0xf]
    %v69 = vld [vmem:[%s0 + $0x64] sm:$0xf]
    %v70 = vld [vmem:[%s0 + $0x68] sm:$0xf]
    %v71 = vld [vmem:[%s0 + $0x6c] sm:$0xf]
    %v72 = vld [vmem:[%s0 + $0x70] sm:$0xf]
    %v73 = vld [vmem:[%s0 + $0x74] sm:$0xf]
    %v74 = vld [vmem:[%s0 + $0x78] sm:$0xf]
    %v75 = vld [vmem:[%s0 + $0x7c] sm:$0xf]
    %v76 = vld [vmem:[%s1] sm:$0xf]
    %v77 = vld [vmem:[%s2] sm:$0x1]
    %v79 = vlaneseq
    %v80 = vshrl.u32 %v79, 7
    %v81 = vsub.s32 0, %v80
    %v82 = vrot.slane %v77, %v81
    %v116 = vunpack.c.l.b16 %v44
    %v117 = vunpack.c.l.b16 %v45
    %v118 = vunpack.c.l.b16 %v46
    %v119 = vunpack.c.l.b16 %v47
    %v120 = vunpack.c.l.b16 %v48
    %v121 = vunpack.c.l.b16 %v49
    %v122 = vunpack.c.l.b16 %v50
    %v123 = vunpack.c.l.b16 %v51
    %v124 = vunpack.c.l.b16 %v52
    %v125 = vunpack.c.l.b16 %v53
    %v126 = vunpack.c.l.b16 %v54
    %v127 = vunpack.c.l.b16 %v55
    %v128 = vunpack.c.l.b16 %v56
    %v129 = vunpack.c.l.b16 %v57
    %v130 = vunpack.c.l.b16 %v58
    %v131 = vunpack.c.l.b16 %v59
    %v132 = vunpack.c.l.b16 %v60
    %v133 = vunpack.c.l.b16 %v61
    %v134 = vunpack.c.l.b16 %v62
    %v135 = vunpack.c.l.b16 %v63
    %v136 = vunpack.c.l.b16 %v64
    %v137 = vunpack.c.l.b16 %v65
    %v138 = vunpack.c.l.b16 %v66
    %v139 = vunpack.c.l.b16 %v67
    %v140 = vunpack.c.l.b16 %v68
    %v141 = vunpack.c.l.b16 %v69
    %v142 = vunpack.c.l.b16 %v70
    %v143 = vunpack.c.l.b16 %v71
    %v144 = vunpack.c.l.b16 %v72
    %v145 = vunpack.c.l.b16 %v73
    %v146 = vunpack.c.l.b16 %v74
    %v147 = vunpack.c.l.b16 %v75
    %v148 = vpack.c.b16 %v117, %v116
    %v149 = vpack.c.b16 %v119, %v118
    %v150 = vpack.c.b16 %v121, %v120
    %v151 = vpack.c.b16 %v123, %v122
    %v152 = vpack.c.b16 %v125, %v124
    %v153 = vpack.c.b16 %v127, %v126
    %v154 = vpack.c.b16 %v129, %v128
    %v155 = vpack.c.b16 %v131, %v130
    %v156 = vpack.c.b16 %v133, %v132
    %v157 = vpack.c.b16 %v135, %v134
    %v158 = vpack.c.b16 %v137, %v136
    %v159 = vpack.c.b16 %v139, %v138
    %v160 = vpack.c.b16 %v141, %v140
    %v161 = vpack.c.b16 %v143, %v142
    %v162 = vpack.c.b16 %v145, %v144
    %v163 = vpack.c.b16 %v147, %v146
    %vm164 = vcmask 64512
    %v166 = vsel %vm164, %v148, 0
    %v169 = vsel %vm164, %v149, 0
    %v172 = vsel %vm164, %v150, 0
    %v175 = vsel %vm164, %v151, 0
    %v178 = vsel %vm164, %v152, 0
    %v181 = vsel %vm164, %v153, 0
    %v184 = vsel %vm164, %v154, 0
    %v187 = vsel %vm164, %v155, 0
    %v190 = vsel %vm164, %v156, 0
    %v193 = vsel %vm164, %v157, 0
    %v196 = vsel %vm164, %v158, 0
    %v199 = vsel %vm164, %v159, 0
    %v202 = vsel %vm164, %v160, 0
    %v205 = vsel %vm164, %v161, 0
    %v208 = vsel %vm164, %v162, 0
    %v211 = vsel %vm164, %v163, 0
    %vm213 = vcmask 1043456
    %v215 = vsel %vm213, %v76, 0
    %217 = vmatprep.subr.bf16.mxu0 0
    %218 = vmatpush1.bf16.msra.mxu0 %v215
    %219 = vmatprep.subr.bf16.mxu0 0
    %220 = vmatpush1.bf16.msra.mxu0 0
    %221 = vmatprep.subr.bf16.mxu0 0
    %222 = vmatpush1.bf16.msra.mxu0 0
    %223 = vmatprep.subr.bf16.mxu0 0
    %224 = vmatpush1.bf16.msra.mxu0 0
    %225 = vmatprep.subr.bf16.mxu0 0
    %226 = vmatpush1.bf16.msra.mxu0 0
    %227 = vmatprep.subr.bf16.mxu0 0
    %228 = vmatpush1.bf16.msra.mxu0 0
    %229 = vmatprep.subr.bf16.mxu0 0
    %230 = vmatpush1.bf16.msra.mxu0 0
    %231 = vmatprep.subr.bf16.mxu0 0
    %232 = vmatpush1.bf16.msra.mxu0 0
    %233 = vmatprep.subr.bf16.mxu0 0
    %234 = vmatpush1.bf16.msra.mxu0 0
    %235 = vmatprep.subr.bf16.mxu0 0
    %236 = vmatpush1.bf16.msra.mxu0 0
    %237 = vmatprep.subr.bf16.mxu0 0
    %238 = vmatpush1.bf16.msra.mxu0 0
    %239 = vmatprep.subr.bf16.mxu0 0
    %240 = vmatpush1.bf16.msra.mxu0 0
    %241 = vmatprep.subr.bf16.mxu0 0
    %242 = vmatpush1.bf16.msra.mxu0 0
    %243 = vmatprep.subr.bf16.mxu0 0
    %244 = vmatpush1.bf16.msra.mxu0 0
    %245 = vmatprep.subr.bf16.mxu0 0
    %246 = vmatpush1.bf16.msra.mxu0 0
    %247 = vmatprep.subr.bf16.mxu0 0
    %248 = vmatpush1.bf16.msra.mxu0 0
    %249 = vmatprep.mubr.bf16.mxu0 0
    %250 = vmatmul.mubr.bf16.gmra.mrb[0].mxu0 %v166
    %v251 = vpop.f32.mrb[0].mxu0
    %v252 = vadd.f32 %v82, %v251
    %v253 = vpop.f32.mrb[0].mxu0
    %v254 = vpop.f32.mrb[0].mxu0
    %v255 = vadd.f32 %v82, %v254
    %v256 = vpop.f32.mrb[0].mxu0
    %257 = vmatprep.mubr.bf16.mxu0 0
    %258 = vmatmul.mubr.bf16.gmra.mrb[0].mxu0 %v169
    %v259 = vpop.f32.mrb[0].mxu0
    %v260 = vadd.f32 %v82, %v259
    %v261 = vpop.f32.mrb[0].mxu0
    %v262 = vpop.f32.mrb[0].mxu0
    %v263 = vadd.f32 %v82, %v262
    %v264 = vpop.f32.mrb[0].mxu0
    %265 = vmatprep.mubr.bf16.mxu0 0
    %266 = vmatmul.mubr.bf16.gmra.mrb[0].mxu0 %v172
    %v267 = vpop.f32.mrb[0].mxu0
    %v268 = vadd.f32 %v82, %v267
    %v269 = vpop.f32.mrb[0].mxu0
    %v270 = vpop.f32.mrb[0].mxu0
    %v271 = vadd.f32 %v82, %v270
    %v272 = vpop.f32.mrb[0].mxu0
    %273 = vmatprep.mubr.bf16.mxu0 0
    %274 = vmatmul.mubr.bf16.gmra.mrb[0].mxu0 %v175
    %v275 = vpop.f32.mrb[0].mxu0
    %v276 = vadd.f32 %v82, %v275
    %v277 = vpop.f32.mrb[0].mxu0
    %v278 = vpop.f32.mrb[0].mxu0
    %v279 = vadd.f32 %v82, %v278
    %v280 = vpop.f32.mrb[0].mxu0
    %281 = vmatprep.mubr.bf16.mxu0 0
    %282 = vmatmul.mubr.bf16.gmra.mrb[0].mxu0 %v178
    %v283 = vpop.f32.mrb[0].mxu0
    %v284 = vadd.f32 %v82, %v283
    %v285 = vpop.f32.mrb[0].mxu0
    %v286 = vpop.f32.mrb[0].mxu0
    %v287 = vadd.f32 %v82, %v286
    %v288 = vpop.f32.mrb[0].mxu0
    %289 = vmatprep.mubr.bf16.mxu0 0
    %290 = vmatmul.mubr.bf16.gmra.mrb[0].mxu0 %v181
    %v291 = vpop.f32.mrb[0].mxu0
    %v292 = vadd.f32 %v82, %v291
    %v293 = vpop.f32.mrb[0].mxu0
    %v294 = vpop.f32.mrb[0].mxu0
    %v295 = vadd.f32 %v82, %v294
    %v296 = vpop.f32.mrb[0].mxu0
    %297 = vmatprep.mubr.bf16.mxu0 0
    %298 = vmatmul.mubr.bf16.gmra.mrb[0].mxu0 %v184
    %v299 = vpop.f32.mrb[0].mxu0
    %v300 = vadd.f32 %v82, %v299
    %v301 = vpop.f32.mrb[0].mxu0
    %v302 = vpop.f32.mrb[0].mxu0
    %v303 = vadd.f32 %v82, %v302
    %v304 = vpop.f32.mrb[0].mxu0
    %305 = vmatprep.mubr.bf16.mxu0 0
    %306 = vmatmul.mubr.bf16.gmra.mrb[0].mxu0 %v187
    %v307 = vpop.f32.mrb[0].mxu0
    %v308 = vadd.f32 %v82, %v307
    %v309 = vpop.f32.mrb[0].mxu0
    %v310 = vpop.f32.mrb[0].mxu0
    %v311 = vadd.f32 %v82, %v310
    %v312 = vpop.f32.mrb[0].mxu0
    %313 = vmatprep.mubr.bf16.mxu0 0
    %314 = vmatmul.mubr.bf16.gmra.mrb[0].mxu0 %v190
    %v315 = vpop.f32.mrb[0].mxu0
    %v316 = vadd.f32 %v82, %v315
    %v317 = vpop.f32.mrb[0].mxu0
    %v318 = vpop.f32.mrb[0].mxu0
    %v319 = vadd.f32 %v82, %v318
    %v320 = vpop.f32.mrb[0].mxu0
    %321 = vmatprep.mubr.bf16.mxu0 0
    %322 = vmatmul.mubr.bf16.gmra.mrb[0].mxu0 %v193
    %v323 = vpop.f32.mrb[0].mxu0
    %v324 = vadd.f32 %v82, %v323
    %v325 = vpop.f32.mrb[0].mxu0
    %v326 = vpop.f32.mrb[0].mxu0
    %v327 = vadd.f32 %v82, %v326
    %v328 = vpop.f32.mrb[0].mxu0
    %329 = vmatprep.mubr.bf16.mxu0 0
    %330 = vmatmul.mubr.bf16.gmra.mrb[0].mxu0 %v196
    %v331 = vpop.f32.mrb[0].mxu0
    %v332 = vadd.f32 %v82, %v331
    %v333 = vpop.f32.mrb[0].mxu0
    %v334 = vpop.f32.mrb[0].mxu0
    %v335 = vadd.f32 %v82, %v334
    %v336 = vpop.f32.mrb[0].mxu0
    %337 = vmatprep.mubr.bf16.mxu0 0
    %338 = vmatmul.mubr.bf16.gmra.mrb[0].mxu0 %v199
    %v339 = vpop.f32.mrb[0].mxu0
    %v340 = vadd.f32 %v82, %v339
    %v341 = vpop.f32.mrb[0].mxu0
    %v342 = vpop.f32.mrb[0].mxu0
    %v343 = vadd.f32 %v82, %v342
    %v344 = vpop.f32.mrb[0].mxu0
    %345 = vmatprep.mubr.bf16.mxu0 0
    %346 = vmatmul.mubr.bf16.gmra.mrb[0].mxu0 %v202
    %v347 = vpop.f32.mrb[0].mxu0
    %v348 = vadd.f32 %v82, %v347
    %v349 = vpop.f32.mrb[0].mxu0
    %v350 = vpop.f32.mrb[0].mxu0
    %v351 = vadd.f32 %v82, %v350
    %v352 = vpop.f32.mrb[0].mxu0
    %353 = vmatprep.mubr.bf16.mxu0 0
    %354 = vmatmul.mubr.bf16.gmra.mrb[0].mxu0 %v205
    %v355 = vpop.f32.mrb[0].mxu0
    %v356 = vadd.f32 %v82, %v355
    %v357 = vpop.f32.mrb[0].mxu0
    %v358 = vpop.f32.mrb[0].mxu0
    %v359 = vadd.f32 %v82, %v358
    %v360 = vpop.f32.mrb[0].mxu0
    %361 = vmatprep.mubr.bf16.mxu0 0
    %362 = vmatmul.mubr.bf16.gmra.mrb[0].mxu0 %v208
    %v363 = vpop.f32.mrb[0].mxu0
    %v364 = vadd.f32 %v82, %v363
    %v365 = vpop.f32.mrb[0].mxu0
    %v366 = vpop.f32.mrb[0].mxu0
    %v367 = vadd.f32 %v82, %v366
    %v368 = vpop.f32.mrb[0].mxu0
    %369 = vmatprep.mubr.bf16.mxu0 0
    %370 = vmatmul.mubr.bf16.gmra.mrb[0].mxu0 %v211
    %v371 = vpop.f32.mrb[0].mxu0
    %v372 = vadd.f32 %v82, %v371
    %v373 = vpop.f32.mrb[0].mxu0
    %v374 = vpop.f32.mrb[0].mxu0
    %v375 = vadd.f32 %v82, %v374
    %v376 = vpop.f32.mrb[0].mxu0
    %377 = vdwg.mxu0
    %v378 = vmax.f32 %v252, 0.0
    %v379 = vmax.f32 %v255, 0.0
    %v380 = vmax.f32 %v260, 0.0
    %v381 = vmax.f32 %v263, 0.0
    %v382 = vmax.f32 %v268, 0.0
    %v383 = vmax.f32 %v271, 0.0
    %v384 = vmax.f32 %v276, 0.0
    %v385 = vmax.f32 %v279, 0.0
    %v386 = vmax.f32 %v284, 0.0
    %v387 = vmax.f32 %v287, 0.0
    %v388 = vmax.f32 %v292, 0.0
    %v389 = vmax.f32 %v295, 0.0
    %v390 = vmax.f32 %v300, 0.0
    %v391 = vmax.f32 %v303, 0.0
    %v392 = vmax.f32 %v308, 0.0
    %v393 = vmax.f32 %v311, 0.0
    %v394 = vmax.f32 %v316, 0.0
    %v395 = vmax.f32 %v319, 0.0
    %v396 = vmax.f32 %v324, 0.0
    %v397 = vmax.f32 %v327, 0.0
    %v398 = vmax.f32 %v332, 0.0
    %v399 = vmax.f32 %v335, 0.0
    %v400 = vmax.f32 %v340, 0.0
    %v401 = vmax.f32 %v343, 0.0
    %v402 = vmax.f32 %v348, 0.0
    %v403 = vmax.f32 %v351, 0.0
    %v404 = vmax.f32 %v356, 0.0
    %v405 = vmax.f32 %v359, 0.0
    %v406 = vmax.f32 %v364, 0.0
    %v407 = vmax.f32 %v367, 0.0
    %v408 = vmax.f32 %v372, 0.0
    %v409 = vmax.f32 %v375, 0.0
    %v410 = vpack.c.bf16 %v379, %v378
    %v411 = vpack.c.bf16 %v381, %v380
    %v412 = vpack.c.bf16 %v383, %v382
    %v413 = vpack.c.bf16 %v385, %v384
    %v414 = vpack.c.bf16 %v387, %v386
    %v415 = vpack.c.bf16 %v389, %v388
    %v416 = vpack.c.bf16 %v391, %v390
    %v417 = vpack.c.bf16 %v393, %v392
    %v418 = vpack.c.bf16 %v395, %v394
    %v419 = vpack.c.bf16 %v397, %v396
    %v420 = vpack.c.bf16 %v399, %v398
    %v421 = vpack.c.bf16 %v401, %v400
    %v422 = vpack.c.bf16 %v403, %v402
    %v423 = vpack.c.bf16 %v405, %v404
    %v424 = vpack.c.bf16 %v407, %v406
    %v425 = vpack.c.bf16 %v409, %v408
    %v426 = vld [vmem:[%s3] sm:$0xf]
    %v427 = vld [vmem:[%s3 + $0x4] sm:$0xf]
    %v428 = vld [vmem:[%s4] sm:$0x1]
    %v430 = vlaneseq
    %v431 = vshrl.u32 %v430, 7
    %v432 = vsub.s32 0, %v431
    %v433 = vrot.slane %v428, %v432
    %v437 = vunpack.c.l.b16 %v426
    %v438 = vunpack.c.l.b16 %v427
    %v439 = vpack.c.b16 %v438, %v437
    %vm441 = vcmask 130048
    %v443 = vsel %vm441, %v410, 0
    %v446 = vsel %vm441, %v411, 0
    %v449 = vsel %vm441, %v412, 0
    %v452 = vsel %vm441, %v413, 0
    %v455 = vsel %vm441, %v414, 0
    %v458 = vsel %vm441, %v415, 0
    %v461 = vsel %vm441, %v416, 0
    %v464 = vsel %vm441, %v417, 0
    %v467 = vsel %vm441, %v418, 0
    %v470 = vsel %vm441, %v419, 0
    %v473 = vsel %vm441, %v420, 0
    %v476 = vsel %vm441, %v421, 0
    %v479 = vsel %vm441, %v422, 0
    %v482 = vsel %vm441, %v423, 0
    %v485 = vsel %vm441, %v424, 0
    %v488 = vsel %vm441, %v425, 0
    %490 = vmatprep.subr.bf16.mxu0 0
    %491 = vmatpush1.bf16.msra.mxu0 %v439
    %492 = vmatprep.subr.bf16.mxu0 0
    %493 = vmatpush1.bf16.msra.mxu0 0
    %494 = vmatprep.subr.bf16.mxu0 0
    %495 = vmatpush1.bf16.msra.mxu0 0
    %496 = vmatprep.subr.bf16.mxu0 0
    %497 = vmatpush1.bf16.msra.mxu0 0
    %498 = vmatprep.subr.bf16.mxu0 0
    %499 = vmatpush1.bf16.msra.mxu0 0
    %500 = vmatprep.subr.bf16.mxu0 0
    %501 = vmatpush1.bf16.msra.mxu0 0
    %502 = vmatprep.subr.bf16.mxu0 0
    %503 = vmatpush1.bf16.msra.mxu0 0
    %504 = vmatprep.subr.bf16.mxu0 0
    %505 = vmatpush1.bf16.msra.mxu0 0
    %506 = vmatprep.subr.bf16.mxu0 0
    %507 = vmatpush1.bf16.msra.mxu0 0
    %508 = vmatprep.subr.bf16.mxu0 0
    %509 = vmatpush1.bf16.msra.mxu0 0
    %510 = vmatprep.subr.bf16.mxu0 0
    %511 = vmatpush1.bf16.msra.mxu0 0
    %512 = vmatprep.subr.bf16.mxu0 0
    %513 = vmatpush1.bf16.msra.mxu0 0
    %514 = vmatprep.subr.bf16.mxu0 0
    %515 = vmatpush1.bf16.msra.mxu0 0
    %516 = vmatprep.subr.bf16.mxu0 0
    %517 = vmatpush1.bf16.msra.mxu0 0
    %518 = vmatprep.subr.bf16.mxu0 0
    %519 = vmatpush1.bf16.msra.mxu0 0
    %520 = vmatprep.subr.bf16.mxu0 0
    %521 = vmatpush1.bf16.msra.mxu0 0
    %522 = vmatprep.mubr.bf16.mxu0 0
    %523 = vmatmul.mubr.bf16.gmra.mrb[0].mxu0 %v443
    %v524 = vpop.f32.mrb[0].mxu0
    %v525 = vadd.f32 %v433, %v524
    %v526 = vpop.f32.mrb[0].mxu0
    %v527 = vpop.f32.mrb[0].mxu0
    %v528 = vadd.f32 %v433, %v527
    %v529 = vpop.f32.mrb[0].mxu0
    %530 = vmatprep.mubr.bf16.mxu0 0
    %531 = vmatmul.mubr.bf16.gmra.mrb[0].mxu0 %v446
    %v532 = vpop.f32.mrb[0].mxu0
    %v533 = vadd.f32 %v433, %v532
    %v534 = vpop.f32.mrb[0].mxu0
    %v535 = vpop.f32.mrb[0].mxu0
    %v536 = vadd.f32 %v433, %v535
    %v537 = vpop.f32.mrb[0].mxu0
    %538 = vmatprep.mubr.bf16.mxu0 0
    %539 = vmatmul.mubr.bf16.gmra.mrb[0].mxu0 %v449
    %v540 = vpop.f32.mrb[0].mxu0
    %v541 = vadd.f32 %v433, %v540
    %v542 = vpop.f32.mrb[0].mxu0
    %v543 = vpop.f32.mrb[0].mxu0
    %v544 = vadd.f32 %v433, %v543
    %v545 = vpop.f32.mrb[0].mxu0
    %546 = vmatprep.mubr.bf16.mxu0 0
    %547 = vmatmul.mubr.bf16.gmra.mrb[0].mxu0 %v452
    %v548 = vpop.f32.mrb[0].mxu0
    %v549 = vadd.f32 %v433, %v548
    %v550 = vpop.f32.mrb[0].mxu0
    %v551 = vpop.f32.mrb[0].mxu0
    %v552 = vadd.f32 %v433, %v551
    %v553 = vpop.f32.mrb[0].mxu0
    %554 = vmatprep.mubr.bf16.mxu0 0
    %555 = vmatmul.mubr.bf16.gmra.mrb[0].mxu0 %v455
    %v556 = vpop.f32.mrb[0].mxu0
    %v557 = vadd.f32 %v433, %v556
    %v558 = vpop.f32.mrb[0].mxu0
    %v559 = vpop.f32.mrb[0].mxu0
    %v560 = vadd.f32 %v433, %v559
    %v561 = vpop.f32.mrb[0].mxu0
    %562 = vmatprep.mubr.bf16.mxu0 0
    %563 = vmatmul.mubr.bf16.gmra.mrb[0].mxu0 %v458
    %v564 = vpop.f32.mrb[0].mxu0
    %v565 = vadd.f32 %v433, %v564
    %v566 = vpop.f32.mrb[0].mxu0
    %v567 = vpop.f32.mrb[0].mxu0
    %v568 = vadd.f32 %v433, %v567
    %v569 = vpop.f32.mrb[0].mxu0
    %570 = vmatprep.mubr.bf16.mxu0 0
    %571 = vmatmul.mubr.bf16.gmra.mrb[0].mxu0 %v461
    %v572 = vpop.f32.mrb[0].mxu0
    %v573 = vadd.f32 %v433, %v572
    %v574 = vpop.f32.mrb[0].mxu0
    %v575 = vpop.f32.mrb[0].mxu0
    %v576 = vadd.f32 %v433, %v575
    %v577 = vpop.f32.mrb[0].mxu0
    %578 = vmatprep.mubr.bf16.mxu0 0
    %579 = vmatmul.mubr.bf16.gmra.mrb[0].mxu0 %v464
    %v580 = vpop.f32.mrb[0].mxu0
    %v581 = vadd.f32 %v433, %v580
    %v582 = vpop.f32.mrb[0].mxu0
    %v583 = vpop.f32.mrb[0].mxu0
    %v584 = vadd.f32 %v433, %v583
    %v585 = vpop.f32.mrb[0].mxu0
    %586 = vmatprep.mubr.bf16.mxu0 0
    %587 = vmatmul.mubr.bf16.gmra.mrb[0].mxu0 %v467
    %v588 = vpop.f32.mrb[0].mxu0
    %v589 = vadd.f32 %v433, %v588
    %v590 = vpop.f32.mrb[0].mxu0
    %v591 = vpop.f32.mrb[0].mxu0
    %v592 = vadd.f32 %v433, %v591
    %v593 = vpop.f32.mrb[0].mxu0
    %594 = vmatprep.mubr.bf16.mxu0 0
    %595 = vmatmul.mubr.bf16.gmra.mrb[0].mxu0 %v470
    %v596 = vpop.f32.mrb[0].mxu0
    %v597 = vadd.f32 %v433, %v596
    %v598 = vpop.f32.mrb[0].mxu0
    %v599 = vpop.f32.mrb[0].mxu0
    %v600 = vadd.f32 %v433, %v599
    %v601 = vpop.f32.mrb[0].mxu0
    %602 = vmatprep.mubr.bf16.mxu0 0
    %603 = vmatmul.mubr.bf16.gmra.mrb[0].mxu0 %v473
    %v604 = vpop.f32.mrb[0].mxu0
    %v605 = vadd.f32 %v433, %v604
    %v606 = vpop.f32.mrb[0].mxu0
    %v607 = vpop.f32.mrb[0].mxu0
    %v608 = vadd.f32 %v433, %v607
    %v609 = vpop.f32.mrb[0].mxu0
    %610 = vmatprep.mubr.bf16.mxu0 0
    %611 = vmatmul.mubr.bf16.gmra.mrb[0].mxu0 %v476
    %v612 = vpop.f32.mrb[0].mxu0
    %v613 = vadd.f32 %v433, %v612
    %v614 = vpop.f32.mrb[0].mxu0
    %v615 = vpop.f32.mrb[0].mxu0
    %v616 = vadd.f32 %v433, %v615
    %v617 = vpop.f32.mrb[0].mxu0
    %618 = vmatprep.mubr.bf16.mxu0 0
    %619 = vmatmul.mubr.bf16.gmra.mrb[0].mxu0 %v479
    %v620 = vpop.f32.mrb[0].mxu0
    %v621 = vadd.f32 %v433, %v620
    %v622 = vpop.f32.mrb[0].mxu0
    %v623 = vpop.f32.mrb[0].mxu0
    %v624 = vadd.f32 %v433, %v623
    %v625 = vpop.f32.mrb[0].mxu0
    %626 = vmatprep.mubr.bf16.mxu0 0
    %627 = vmatmul.mubr.bf16.gmra.mrb[0].mxu0 %v482
    %v628 = vpop.f32.mrb[0].mxu0
    %v629 = vadd.f32 %v433, %v628
    %v630 = vpop.f32.mrb[0].mxu0
    %v631 = vpop.f32.mrb[0].mxu0
    %v632 = vadd.f32 %v433, %v631
    %v633 = vpop.f32.mrb[0].mxu0
    %634 = vmatprep.mubr.bf16.mxu0 0
    %635 = vmatmul.mubr.bf16.gmra.mrb[0].mxu0 %v485
    %v636 = vpop.f32.mrb[0].mxu0
    %v637 = vadd.f32 %v433, %v636
    %v638 = vpop.f32.mrb[0].mxu0
    %v639 = vpop.f32.mrb[0].mxu0
    %v640 = vadd.f32 %v433, %v639
    %v641 = vpop.f32.mrb[0].mxu0
    %642 = vmatprep.mubr.bf16.mxu0 0
    %643 = vmatmul.mubr.bf16.gmra.mrb[0].mxu0 %v488
    %v644 = vpop.f32.mrb[0].mxu0
    %v645 = vadd.f32 %v433, %v644
    %v646 = vpop.f32.mrb[0].mxu0
    %v647 = vpop.f32.mrb[0].mxu0
    %v648 = vadd.f32 %v433, %v647
    %v649 = vpop.f32.mrb[0].mxu0
    %650 = vdwg.mxu0
    %v651 = vmax.f32 %v525, 0.0
    %v652 = vmax.f32 %v528, 0.0
    %v653 = vmax.f32 %v533, 0.0
    %v654 = vmax.f32 %v536, 0.0
    %v655 = vmax.f32 %v541, 0.0
    %v656 = vmax.f32 %v544, 0.0
    %v657 = vmax.f32 %v549, 0.0
    %v658 = vmax.f32 %v552, 0.0
    %v659 = vmax.f32 %v557, 0.0
    %v660 = vmax.f32 %v560, 0.0
    %v661 = vmax.f32 %v565, 0.0
    %v662 = vmax.f32 %v568, 0.0
    %v663 = vmax.f32 %v573, 0.0
    %v664 = vmax.f32 %v576, 0.0
    %v665 = vmax.f32 %v581, 0.0
    %v666 = vmax.f32 %v584, 0.0
    %v667 = vmax.f32 %v589, 0.0
    %v668 = vmax.f32 %v592, 0.0
    %v669 = vmax.f32 %v597, 0.0
    %v670 = vmax.f32 %v600, 0.0
    %v671 = vmax.f32 %v605, 0.0
    %v672 = vmax.f32 %v608, 0.0
    %v673 = vmax.f32 %v613, 0.0
    %v674 = vmax.f32 %v616, 0.0
    %v675 = vmax.f32 %v621, 0.0
    %v676 = vmax.f32 %v624, 0.0
    %v677 = vmax.f32 %v629, 0.0
    %v678 = vmax.f32 %v632, 0.0
    %v679 = vmax.f32 %v637, 0.0
    %v680 = vmax.f32 %v640, 0.0
    %v681 = vmax.f32 %v645, 0.0
    %v682 = vmax.f32 %v648, 0.0
    %v683 = vpack.c.bf16 %v652, %v651
    %v684 = vpack.c.bf16 %v654, %v653
    %v685 = vpack.c.bf16 %v656, %v655
    %v686 = vpack.c.bf16 %v658, %v657
    %v687 = vpack.c.bf16 %v660, %v659
    %v688 = vpack.c.bf16 %v662, %v661
    %v689 = vpack.c.bf16 %v664, %v663
    %v690 = vpack.c.bf16 %v666, %v665
    %v691 = vpack.c.bf16 %v668, %v667
    %v692 = vpack.c.bf16 %v670, %v669
    %v693 = vpack.c.bf16 %v672, %v671
    %v694 = vpack.c.bf16 %v674, %v673
    %v695 = vpack.c.bf16 %v676, %v675
    %v696 = vpack.c.bf16 %v678, %v677
    %v697 = vpack.c.bf16 %v680, %v679
    %v698 = vpack.c.bf16 %v682, %v681
    %v699 = vld [vmem:[%s5] sm:$0xf]
    %v700 = vld [vmem:[%s5 + $0x4] sm:$0xf]
    %v701 = vld [vmem:[%s5 + $0x8] sm:$0xf]
    %v702 = vld [vmem:[%s5 + $0xc] sm:$0xf]
    %v703 = vld [vmem:[%s6] sm:$0x1]
    %v705 = vlaneseq
    %v706 = vshrl.u32 %v705, 7
    %v707 = vsub.s32 0, %v706
    %v708 = vrot.slane %v703, %v707
    %v714 = vunpack.c.l.b16 %v699
    %v715 = vunpack.c.l.b16 %v700
    %v716 = vunpack.c.l.b16 %v701
    %v717 = vunpack.c.l.b16 %v702
    %v718 = vpack.c.b16 %v715, %v714
    %v719 = vpack.c.b16 %v717, %v716
    %vm722 = vcmask 261120
    %v724 = vsel %vm722, %v683, 0
    %v727 = vsel %vm722, %v684, 0
    %v730 = vsel %vm722, %v685, 0
    %v733 = vsel %vm722, %v686, 0
    %v736 = vsel %vm722, %v687, 0
    %v739 = vsel %vm722, %v688, 0
    %v742 = vsel %vm722, %v689, 0
    %v745 = vsel %vm722, %v690, 0
    %v748 = vsel %vm722, %v691, 0
    %v751 = vsel %vm722, %v692, 0
    %v754 = vsel %vm722, %v693, 0
    %v757 = vsel %vm722, %v694, 0
    %v760 = vsel %vm722, %v695, 0
    %v763 = vsel %vm722, %v696, 0
    %v766 = vsel %vm722, %v697, 0
    %v769 = vsel %vm722, %v698, 0
    %771 = vmatprep.subr.bf16.mxu0 0
    %772 = vmatpush1.bf16.msra.mxu0 %v718
    %773 = vmatprep.subr.bf16.mxu0 0
    %774 = vmatpush1.bf16.msra.mxu0 %v719
    %775 = vmatprep.subr.bf16.mxu0 0
    %776 = vmatpush1.bf16.msra.mxu0 0
    %777 = vmatprep.subr.bf16.mxu0 0
    %778 = vmatpush1.bf16.msra.mxu0 0
    %779 = vmatprep.subr.bf16.mxu0 0
    %780 = vmatpush1.bf16.msra.mxu0 0
    %781 = vmatprep.subr.bf16.mxu0 0
    %782 = vmatpush1.bf16.msra.mxu0 0
    %783 = vmatprep.subr.bf16.mxu0 0
    %784 = vmatpush1.bf16.msra.mxu0 0
    %785 = vmatprep.subr.bf16.mxu0 0
    %786 = vmatpush1.bf16.msra.mxu0 0
    %787 = vmatprep.subr.bf16.mxu0 0
    %788 = vmatpush1.bf16.msra.mxu0 0
    %789 = vmatprep.subr.bf16.mxu0 0
    %790 = vmatpush1.bf16.msra.mxu0 0
    %791 = vmatprep.subr.bf16.mxu0 0
    %792 = vmatpush1.bf16.msra.mxu0 0
    %793 = vmatprep.subr.bf16.mxu0 0
    %794 = vmatpush1.bf16.msra.mxu0 0
    %795 = vmatprep.subr.bf16.mxu0 0
    %796 = vmatpush1.bf16.msra.mxu0 0
    %797 = vmatprep.subr.bf16.mxu0 0
    %798 = vmatpush1.bf16.msra.mxu0 0
    %799 = vmatprep.subr.bf16.mxu0 0
    %800 = vmatpush1.bf16.msra.mxu0 0
    %801 = vmatprep.subr.bf16.mxu0 0
    %802 = vmatpush1.bf16.msra.mxu0 0
    %803 = vmatprep.mubr.bf16.mxu0 0
    %804 = vmatmul.mubr.bf16.gmra.mrb[0].mxu0 %v724
    %v805 = vpop.f32.mrb[0].mxu0
    %v806 = vadd.f32 %v708, %v805
    %v807 = vpop.f32.mrb[0].mxu0
    %v808 = vpop.f32.mrb[0].mxu0
    %v809 = vadd.f32 %v708, %v808
    %v810 = vpop.f32.mrb[0].mxu0
    %811 = vmatprep.mubr.bf16.mxu0 0
    %812 = vmatmul.mubr.bf16.gmra.mrb[0].mxu0 %v727
    %v813 = vpop.f32.mrb[0].mxu0
    %v814 = vadd.f32 %v708, %v813
    %v815 = vpop.f32.mrb[0].mxu0
    %v816 = vpop.f32.mrb[0].mxu0
    %v817 = vadd.f32 %v708, %v816
    %v818 = vpop.f32.mrb[0].mxu0
    %819 = vmatprep.mubr.bf16.mxu0 0
    %820 = vmatmul.mubr.bf16.gmra.mrb[0].mxu0 %v730
    %v821 = vpop.f32.mrb[0].mxu0
    %v822 = vadd.f32 %v708, %v821
    %v823 = vpop.f32.mrb[0].mxu0
    %v824 = vpop.f32.mrb[0].mxu0
    %v825 = vadd.f32 %v708, %v824
    %v826 = vpop.f32.mrb[0].mxu0
    %827 = vmatprep.mubr.bf16.mxu0 0
    %828 = vmatmul.mubr.bf16.gmra.mrb[0].mxu0 %v733
    %v829 = vpop.f32.mrb[0].mxu0
    %v830 = vadd.f32 %v708, %v829
    %v831 = vpop.f32.mrb[0].mxu0
    %v832 = vpop.f32.mrb[0].mxu0
    %v833 = vadd.f32 %v708, %v832
    %v834 = vpop.f32.mrb[0].mxu0
    %835 = vmatprep.mubr.bf16.mxu0 0
    %836 = vmatmul.mubr.bf16.gmra.mrb[0].mxu0 %v736
    %v837 = vpop.f32.mrb[0].mxu0
    %v838 = vadd.f32 %v708, %v837
    %v839 = vpop.f32.mrb[0].mxu0
    %v840 = vpop.f32.mrb[0].mxu0
    %v841 = vadd.f32 %v708, %v840
    %v842 = vpop.f32.mrb[0].mxu0
    %843 = vmatprep.mubr.bf16.mxu0 0
    %844 = vmatmul.mubr.bf16.gmra.mrb[0].mxu0 %v739
    %v845 = vpop.f32.mrb[0].mxu0
    %v846 = vadd.f32 %v708, %v845
    %v847 = vpop.f32.mrb[0].mxu0
    %v848 = vpop.f32.mrb[0].mxu0
    %v849 = vadd.f32 %v708, %v848
    %v850 = vpop.f32.mrb[0].mxu0
    %851 = vmatprep.mubr.bf16.mxu0 0
    %852 = vmatmul.mubr.bf16.gmra.mrb[0].mxu0 %v742
    %v853 = vpop.f32.mrb[0].mxu0
    %v854 = vadd.f32 %v708, %v853
    %v855 = vpop.f32.mrb[0].mxu0
    %v856 = vpop.f32.mrb[0].mxu0
    %v857 = vadd.f32 %v708, %v856
    %v858 = vpop.f32.mrb[0].mxu0
    %859 = vmatprep.mubr.bf16.mxu0 0
    %860 = vmatmul.mubr.bf16.gmra.mrb[0].mxu0 %v745
    %v861 = vpop.f32.mrb[0].mxu0
    %v862 = vadd.f32 %v708, %v861
    %v863 = vpop.f32.mrb[0].mxu0
    %v864 = vpop.f32.mrb[0].mxu0
    %v865 = vadd.f32 %v708, %v864
    %v866 = vpop.f32.mrb[0].mxu0
    %867 = vmatprep.mubr.bf16.mxu0 0
    %868 = vmatmul.mubr.bf16.gmra.mrb[0].mxu0 %v748
    %v869 = vpop.f32.mrb[0].mxu0
    %v870 = vadd.f32 %v708, %v869
    %v871 = vpop.f32.mrb[0].mxu0
    %v872 = vpop.f32.mrb[0].mxu0
    %v873 = vadd.f32 %v708, %v872
    %v874 = vpop.f32.mrb[0].mxu0
    %875 = vmatprep.mubr.bf16.mxu0 0
    %876 = vmatmul.mubr.bf16.gmra.mrb[0].mxu0 %v751
    %v877 = vpop.f32.mrb[0].mxu0
    %v878 = vadd.f32 %v708, %v877
    %v879 = vpop.f32.mrb[0].mxu0
    %v880 = vpop.f32.mrb[0].mxu0
    %v881 = vadd.f32 %v708, %v880
    %v882 = vpop.f32.mrb[0].mxu0
    %883 = vmatprep.mubr.bf16.mxu0 0
    %884 = vmatmul.mubr.bf16.gmra.mrb[0].mxu0 %v754
    %v885 = vpop.f32.mrb[0].mxu0
    %v886 = vadd.f32 %v708, %v885
    %v887 = vpop.f32.mrb[0].mxu0
    %v888 = vpop.f32.mrb[0].mxu0
    %v889 = vadd.f32 %v708, %v888
    %v890 = vpop.f32.mrb[0].mxu0
    %891 = vmatprep.mubr.bf16.mxu0 0
    %892 = vmatmul.mubr.bf16.gmra.mrb[0].mxu0 %v757
    %v893 = vpop.f32.mrb[0].mxu0
    %v894 = vadd.f32 %v708, %v893
    %v895 = vpop.f32.mrb[0].mxu0
    %v896 = vpop.f32.mrb[0].mxu0
    %v897 = vadd.f32 %v708, %v896
    %v898 = vpop.f32.mrb[0].mxu0
    %899 = vmatprep.mubr.bf16.mxu0 0
    %900 = vmatmul.mubr.bf16.gmra.mrb[0].mxu0 %v760
    %v901 = vpop.f32.mrb[0].mxu0
    %v902 = vadd.f32 %v708, %v901
    %v903 = vpop.f32.mrb[0].mxu0
    %v904 = vpop.f32.mrb[0].mxu0
    %v905 = vadd.f32 %v708, %v904
    %v906 = vpop.f32.mrb[0].mxu0
    %907 = vmatprep.mubr.bf16.mxu0 0
    %908 = vmatmul.mubr.bf16.gmra.mrb[0].mxu0 %v763
    %v909 = vpop.f32.mrb[0].mxu0
    %v910 = vadd.f32 %v708, %v909
    %v911 = vpop.f32.mrb[0].mxu0
    %v912 = vpop.f32.mrb[0].mxu0
    %v913 = vadd.f32 %v708, %v912
    %v914 = vpop.f32.mrb[0].mxu0
    %915 = vmatprep.mubr.bf16.mxu0 0
    %916 = vmatmul.mubr.bf16.gmra.mrb[0].mxu0 %v766
    %v917 = vpop.f32.mrb[0].mxu0
    %v918 = vadd.f32 %v708, %v917
    %v919 = vpop.f32.mrb[0].mxu0
    %v920 = vpop.f32.mrb[0].mxu0
    %v921 = vadd.f32 %v708, %v920
    %v922 = vpop.f32.mrb[0].mxu0
    %923 = vmatprep.mubr.bf16.mxu0 0
    %924 = vmatmul.mubr.bf16.gmra.mrb[0].mxu0 %v769
    %v925 = vpop.f32.mrb[0].mxu0
    %v926 = vadd.f32 %v708, %v925
    %v927 = vpop.f32.mrb[0].mxu0
    %v928 = vpop.f32.mrb[0].mxu0
    %v929 = vadd.f32 %v708, %v928
    %v930 = vpop.f32.mrb[0].mxu0
    %931 = vdwg.mxu0
    %v932 = vmax.f32 %v806, 0.0
    %v933 = vmax.f32 %v809, 0.0
    %v934 = vmax.f32 %v814, 0.0
    %v935 = vmax.f32 %v817, 0.0
    %v936 = vmax.f32 %v822, 0.0
    %v937 = vmax.f32 %v825, 0.0
    %v938 = vmax.f32 %v830, 0.0
    %v939 = vmax.f32 %v833, 0.0
    %v940 = vmax.f32 %v838, 0.0
    %v941 = vmax.f32 %v841, 0.0
    %v942 = vmax.f32 %v846, 0.0
    %v943 = vmax.f32 %v849, 0.0
    %v944 = vmax.f32 %v854, 0.0
    %v945 = vmax.f32 %v857, 0.0
    %v946 = vmax.f32 %v862, 0.0
    %v947 = vmax.f32 %v865, 0.0
    %v948 = vmax.f32 %v870, 0.0
    %v949 = vmax.f32 %v873, 0.0
    %v950 = vmax.f32 %v878, 0.0
    %v951 = vmax.f32 %v881, 0.0
    %v952 = vmax.f32 %v886, 0.0
    %v953 = vmax.f32 %v889, 0.0
    %v954 = vmax.f32 %v894, 0.0
    %v955 = vmax.f32 %v897, 0.0
    %v956 = vmax.f32 %v902, 0.0
    %v957 = vmax.f32 %v905, 0.0
    %v958 = vmax.f32 %v910, 0.0
    %v959 = vmax.f32 %v913, 0.0
    %v960 = vmax.f32 %v918, 0.0
    %v961 = vmax.f32 %v921, 0.0
    %v962 = vmax.f32 %v926, 0.0
    %v963 = vmax.f32 %v929, 0.0
    %v964 = vpack.c.bf16 %v933, %v932
    %v965 = vpack.c.bf16 %v935, %v934
    %v966 = vpack.c.bf16 %v937, %v936
    %v967 = vpack.c.bf16 %v939, %v938
    %v968 = vpack.c.bf16 %v941, %v940
    %v969 = vpack.c.bf16 %v943, %v942
    %v970 = vpack.c.bf16 %v945, %v944
    %v971 = vpack.c.bf16 %v947, %v946
    %v972 = vpack.c.bf16 %v949, %v948
    %v973 = vpack.c.bf16 %v951, %v950
    %v974 = vpack.c.bf16 %v953, %v952
    %v975 = vpack.c.bf16 %v955, %v954
    %v976 = vpack.c.bf16 %v957, %v956
    %v977 = vpack.c.bf16 %v959, %v958
    %v978 = vpack.c.bf16 %v961, %v960
    %v979 = vpack.c.bf16 %v963, %v962
    %vm980 = vcmask 523264
    %v983 = vsel %vm980, %v964, 4286644096
    %v986 = vsel %vm980, %v965, 4286644096
    %v989 = vsel %vm980, %v966, 4286644096
    %v992 = vsel %vm980, %v967, 4286644096
    %v995 = vsel %vm980, %v968, 4286644096
    %v997 = vmax.bf16 %v983, %v995
    %v999 = vsel %vm980, %v969, 4286644096
    %v1001 = vmax.bf16 %v986, %v999
    %v1003 = vsel %vm980, %v970, 4286644096
    %v1005 = vmax.bf16 %v989, %v1003
    %v1007 = vsel %vm980, %v971, 4286644096
    %v1009 = vmax.bf16 %v992, %v1007
    %v1011 = vsel %vm980, %v972, 4286644096
    %v1013 = vmax.bf16 %v997, %v1011
    %v1015 = vsel %vm980, %v973, 4286644096
    %v1017 = vmax.bf16 %v1001, %v1015
    %v1019 = vsel %vm980, %v974, 4286644096
    %v1021 = vmax.bf16 %v1005, %v1019
    %v1023 = vsel %vm980, %v975, 4286644096
    %v1025 = vmax.bf16 %v1009, %v1023
    %v1027 = vsel %vm980, %v976, 4286644096
    %v1029 = vmax.bf16 %v1013, %v1027
    %v1031 = vsel %vm980, %v977, 4286644096
    %v1033 = vmax.bf16 %v1017, %v1031
    %v1035 = vsel %vm980, %v978, 4286644096
    %v1037 = vmax.bf16 %v1021, %v1035
    %v1039 = vsel %vm980, %v979, 4286644096
    %v1041 = vmax.bf16 %v1025, %v1039
    %v1042 = vmax.bf16 %v1029, %v1033
    %v1043 = vmax.bf16 %v1037, %v1041
    %v1044 = vmax.bf16 %v1042, %v1043
    %v1045 = vld [vmem:[%s7] sm:$0xf]
    %v1046 = vld [vmem:[%s7 + $0x4] sm:$0xf]
    %v1047 = vld [vmem:[%s7 + $0x8] sm:$0xf]
    %v1048 = vld [vmem:[%s7 + $0xc] sm:$0xf]
    %v1049 = vld [vmem:[%s7 + $0x10] sm:$0xf]
    %v1050 = vld [vmem:[%s7 + $0x14] sm:$0xf]
    %v1051 = vld [vmem:[%s7 + $0x18] sm:$0xf]
    %v1052 = vld [vmem:[%s7 + $0x1c] sm:$0xf]
    %v1061 = vunpack.c.l.b16 %v1045
    %v1062 = vunpack.c.l.b16 %v1046
    %v1063 = vunpack.c.l.b16 %v1047
    %v1064 = vunpack.c.l.b16 %v1048
    %v1065 = vunpack.c.l.b16 %v1049
    %v1066 = vunpack.c.l.b16 %v1050
    %v1067 = vunpack.c.l.b16 %v1051
    %v1068 = vunpack.c.l.b16 %v1052
    %v1069 = vpack.c.b16 %v1062, %v1061
    %v1070 = vpack.c.b16 %v1064, %v1063
    %v1071 = vpack.c.b16 %v1066, %v1065
    %v1072 = vpack.c.b16 %v1068, %v1067
    %v1077 = vsel %vm980, %v964, 0
    %v1079 = vsel %vm980, %v965, 0
    %v1081 = vsel %vm980, %v966, 0
    %v1083 = vsel %vm980, %v967, 0
    %v1085 = vsel %vm980, %v968, 0
    %v1087 = vsel %vm980, %v969, 0
    %v1089 = vsel %vm980, %v970, 0
    %v1091 = vsel %vm980, %v971, 0
    %v1093 = vsel %vm980, %v972, 0
    %v1095 = vsel %vm980, %v973, 0
    %v1097 = vsel %vm980, %v974, 0
    %v1099 = vsel %vm980, %v975, 0
    %v1101 = vsel %vm980, %v976, 0
    %v1103 = vsel %vm980, %v977, 0
    %v1105 = vsel %vm980, %v978, 0
    %v1107 = vsel %vm980, %v979, 0
    %1109 = vmatprep.subr.bf16.mxu0 0
    %1110 = vmatpush1.bf16.msra.mxu0 %v1069
    %1111 = vmatprep.subr.bf16.mxu0 0
    %1112 = vmatpush1.bf16.msra.mxu0 %v1070
    %1113 = vmatprep.subr.bf16.mxu0 0
    %1114 = vmatpush1.bf16.msra.mxu0 %v1071
    %1115 = vmatprep.subr.bf16.mxu0 0
    %1116 = vmatpush1.bf16.msra.mxu0 %v1072
    %1117 = vmatprep.subr.bf16.mxu0 0
    %1118 = vmatpush1.bf16.msra.mxu0 0
    %1119 = vmatprep.subr.bf16.mxu0 0
    %1120 = vmatpush1.bf16.msra.mxu0 0
    %1121 = vmatprep.subr.bf16.mxu0 0
    %1122 = vmatpush1.bf16.msra.mxu0 0
    %1123 = vmatprep.subr.bf16.mxu0 0
    %1124 = vmatpush1.bf16.msra.mxu0 0
    %1125 = vmatprep.subr.bf16.mxu0 0
    %1126 = vmatpush1.bf16.msra.mxu0 0
    %1127 = vmatprep.subr.bf16.mxu0 0
    %1128 = vmatpush1.bf16.msra.mxu0 0
    %1129 = vmatprep.subr.bf16.mxu0 0
    %1130 = vmatpush1.bf16.msra.mxu0 0
    %1131 = vmatprep.subr.bf16.mxu0 0
    %1132 = vmatpush1.bf16.msra.mxu0 0
    %1133 = vmatprep.subr.bf16.mxu0 0
    %1134 = vmatpush1.bf16.msra.mxu0 0
    %1135 = vmatprep.subr.bf16.mxu0 0
    %1136 = vmatpush1.bf16.msra.mxu0 0
    %1137 = vmatprep.subr.bf16.mxu0 0
    %1138 = vmatpush1.bf16.msra.mxu0 0
    %1139 = vmatprep.subr.bf16.mxu0 0
    %1140 = vmatpush1.bf16.msra.mxu0 0
    %1141 = vmatprep.mubr.bf16.mxu0 0
    %1142 = vmatmul.mubr.bf16.gmra.mrb[0].mxu0 %v1077
    %v1143 = vpop.f32.mrb[0].mxu0
    %v1144 = vadd.f32 0.0, %v1143
    %v1145 = vpop.f32.mrb[0].mxu0
    %v1146 = vpop.f32.mrb[0].mxu0
    %v1147 = vadd.f32 0.0, %v1146
    %v1148 = vpop.f32.mrb[0].mxu0
    %1149 = vmatprep.mubr.bf16.mxu0 0
    %1150 = vmatmul.mubr.bf16.gmra.mrb[0].mxu0 %v1079
    %v1151 = vpop.f32.mrb[0].mxu0
    %v1152 = vadd.f32 0.0, %v1151
    %v1153 = vpop.f32.mrb[0].mxu0
    %v1154 = vpop.f32.mrb[0].mxu0
    %v1155 = vadd.f32 0.0, %v1154
    %v1156 = vpop.f32.mrb[0].mxu0
    %1157 = vmatprep.mubr.bf16.mxu0 0
    %1158 = vmatmul.mubr.bf16.gmra.mrb[0].mxu0 %v1081
    %v1159 = vpop.f32.mrb[0].mxu0
    %v1160 = vadd.f32 0.0, %v1159
    %v1161 = vpop.f32.mrb[0].mxu0
    %v1162 = vpop.f32.mrb[0].mxu0
    %v1163 = vadd.f32 0.0, %v1162
    %v1164 = vpop.f32.mrb[0].mxu0
    %1165 = vmatprep.mubr.bf16.mxu0 0
    %1166 = vmatmul.mubr.bf16.gmra.mrb[0].mxu0 %v1083
    %v1167 = vpop.f32.mrb[0].mxu0
    %v1168 = vadd.f32 0.0, %v1167
    %v1169 = vpop.f32.mrb[0].mxu0
    %v1170 = vpop.f32.mrb[0].mxu0
    %v1171 = vadd.f32 0.0, %v1170
    %v1172 = vpop.f32.mrb[0].mxu0
    %1173 = vmatprep.mubr.bf16.mxu0 0
    %1174 = vmatmul.mubr.bf16.gmra.mrb[0].mxu0 %v1085
    %v1175 = vpop.f32.mrb[0].mxu0
    %v1176 = vadd.f32 0.0, %v1175
    %v1177 = vpop.f32.mrb[0].mxu0
    %v1178 = vpop.f32.mrb[0].mxu0
    %v1179 = vadd.f32 0.0, %v1178
    %v1180 = vpop.f32.mrb[0].mxu0
    %1181 = vmatprep.mubr.bf16.mxu0 0
    %1182 = vmatmul.mubr.bf16.gmra.mrb[0].mxu0 %v1087
    %v1183 = vpop.f32.mrb[0].mxu0
    %v1184 = vadd.f32 0.0, %v1183
    %v1185 = vpop.f32.mrb[0].mxu0
    %v1186 = vpop.f32.mrb[0].mxu0
    %v1187 = vadd.f32 0.0, %v1186
    %v1188 = vpop.f32.mrb[0].mxu0
    %1189 = vmatprep.mubr.bf16.mxu0 0
    %1190 = vmatmul.mubr.bf16.gmra.mrb[0].mxu0 %v1089
    %v1191 = vpop.f32.mrb[0].mxu0
    %v1192 = vadd.f32 0.0, %v1191
    %v1193 = vpop.f32.mrb[0].mxu0
    %v1194 = vpop.f32.mrb[0].mxu0
    %v1195 = vadd.f32 0.0, %v1194
    %v1196 = vpop.f32.mrb[0].mxu0
    %1197 = vmatprep.mubr.bf16.mxu0 0
    %1198 = vmatmul.mubr.bf16.gmra.mrb[0].mxu0 %v1091
    %v1199 = vpop.f32.mrb[0].mxu0
    %v1200 = vadd.f32 0.0, %v1199
    %v1201 = vpop.f32.mrb[0].mxu0
    %v1202 = vpop.f32.mrb[0].mxu0
    %v1203 = vadd.f32 0.0, %v1202
    %v1204 = vpop.f32.mrb[0].mxu0
    %1205 = vmatprep.mubr.bf16.mxu0 0
    %1206 = vmatmul.mubr.bf16.gmra.mrb[0].mxu0 %v1093
    %v1207 = vpop.f32.mrb[0].mxu0
    %v1208 = vadd.f32 0.0, %v1207
    %v1209 = vpop.f32.mrb[0].mxu0
    %v1210 = vpop.f32.mrb[0].mxu0
    %v1211 = vadd.f32 0.0, %v1210
    %v1212 = vpop.f32.mrb[0].mxu0
    %1213 = vmatprep.mubr.bf16.mxu0 0
    %1214 = vmatmul.mubr.bf16.gmra.mrb[0].mxu0 %v1095
    %v1215 = vpop.f32.mrb[0].mxu0
    %v1216 = vadd.f32 0.0, %v1215
    %v1217 = vpop.f32.mrb[0].mxu0
    %v1218 = vpop.f32.mrb[0].mxu0
    %v1219 = vadd.f32 0.0, %v1218
    %v1220 = vpop.f32.mrb[0].mxu0
    %1221 = vmatprep.mubr.bf16.mxu0 0
    %1222 = vmatmul.mubr.bf16.gmra.mrb[0].mxu0 %v1097
    %v1223 = vpop.f32.mrb[0].mxu0
    %v1224 = vadd.f32 0.0, %v1223
    %v1225 = vpop.f32.mrb[0].mxu0
    %v1226 = vpop.f32.mrb[0].mxu0
    %v1227 = vadd.f32 0.0, %v1226
    %v1228 = vpop.f32.mrb[0].mxu0
    %1229 = vmatprep.mubr.bf16.mxu0 0
    %1230 = vmatmul.mubr.bf16.gmra.mrb[0].mxu0 %v1099
    %v1231 = vpop.f32.mrb[0].mxu0
    %v1232 = vadd.f32 0.0, %v1231
    %v1233 = vpop.f32.mrb[0].mxu0
    %v1234 = vpop.f32.mrb[0].mxu0
    %v1235 = vadd.f32 0.0, %v1234
    %v1236 = vpop.f32.mrb[0].mxu0
    %1237 = vmatprep.mubr.bf16.mxu0 0
    %1238 = vmatmul.mubr.bf16.gmra.mrb[0].mxu0 %v1101
    %v1239 = vpop.f32.mrb[0].mxu0
    %v1240 = vadd.f32 0.0, %v1239
    %v1241 = vpop.f32.mrb[0].mxu0
    %v1242 = vpop.f32.mrb[0].mxu0
    %v1243 = vadd.f32 0.0, %v1242
    %v1244 = vpop.f32.mrb[0].mxu0
    %1245 = vmatprep.mubr.bf16.mxu0 0
    %1246 = vmatmul.mubr.bf16.gmra.mrb[0].mxu0 %v1103
    %v1247 = vpop.f32.mrb[0].mxu0
    %v1248 = vadd.f32 0.0, %v1247
    %v1249 = vpop.f32.mrb[0].mxu0
    %v1250 = vpop.f32.mrb[0].mxu0
    %v1251 = vadd.f32 0.0, %v1250
    %v1252 = vpop.f32.mrb[0].mxu0
    %1253 = vmatprep.mubr.bf16.mxu0 0
    %1254 = vmatmul.mubr.bf16.gmra.mrb[0].mxu0 %v1105
    %v1255 = vpop.f32.mrb[0].mxu0
    %v1256 = vadd.f32 0.0, %v1255
    %v1257 = vpop.f32.mrb[0].mxu0
    %v1258 = vpop.f32.mrb[0].mxu0
    %v1259 = vadd.f32 0.0, %v1258
    %v1260 = vpop.f32.mrb[0].mxu0
    %1261 = vmatprep.mubr.bf16.mxu0 0
    %1262 = vmatmul.mubr.bf16.gmra.mrb[0].mxu0 %v1107
    %v1263 = vpop.f32.mrb[0].mxu0
    %v1264 = vadd.f32 0.0, %v1263
    %v1265 = vpop.f32.mrb[0].mxu0
    %v1266 = vpop.f32.mrb[0].mxu0
    %v1267 = vadd.f32 0.0, %v1266
    %v1268 = vpop.f32.mrb[0].mxu0
    %1269 = vdwg.mxu0
    %v1270 = vld [vmem:[%s8] sm:$0xf]
    %v1271 = vld [vmem:[%s8 + $0x4] sm:$0xf]
    %v1272 = vld [vmem:[%s8 + $0x8] sm:$0xf]
    %v1273 = vld [vmem:[%s8 + $0xc] sm:$0xf]
    %v1274 = vld [vmem:[%s8 + $0x10] sm:$0xf]
    %v1275 = vld [vmem:[%s8 + $0x14] sm:$0xf]
    %v1276 = vld [vmem:[%s8 + $0x18] sm:$0xf]
    %v1277 = vld [vmem:[%s8 + $0x1c] sm:$0xf]
    %v1278 = vld [vmem:[%s9] sm:$0x1]
    %v1280 = vlaneseq
    %v1281 = vshrl.u32 %v1280, 7
    %v1282 = vsub.s32 0, %v1281
    %v1283 = vrot.slane %v1278, %v1282
    %v1293 = vunpack.c.l.b16 %v1270
    %v1294 = vunpack.c.l.b16 %v1271
    %v1295 = vunpack.c.l.b16 %v1272
    %v1296 = vunpack.c.l.b16 %v1273
    %v1297 = vunpack.c.l.b16 %v1274
    %v1298 = vunpack.c.l.b16 %v1275
    %v1299 = vunpack.c.l.b16 %v1276
    %v1300 = vunpack.c.l.b16 %v1277
    %v1301 = vpack.c.b16 %v1294, %v1293
    %v1302 = vpack.c.b16 %v1296, %v1295
    %v1303 = vpack.c.b16 %v1298, %v1297
    %v1304 = vpack.c.b16 %v1300, %v1299
    %v1310 = vsel %vm980, %v1044, 0
    %1312 = vmatprep.subr.bf16.mxu0 0
    %1313 = vmatpush1.bf16.msra.mxu0 %v1301
    %1314 = vmatprep.subr.bf16.mxu0 0
    %1315 = vmatpush1.bf16.msra.mxu0 %v1302
    %1316 = vmatprep.subr.bf16.mxu0 0
    %1317 = vmatpush1.bf16.msra.mxu0 %v1303
    %1318 = vmatprep.subr.bf16.mxu0 0
    %1319 = vmatpush1.bf16.msra.mxu0 %v1304
    %1320 = vmatprep.subr.bf16.mxu0 0
    %1321 = vmatpush1.bf16.msra.mxu0 0
    %1322 = vmatprep.subr.bf16.mxu0 0
    %1323 = vmatpush1.bf16.msra.mxu0 0
    %1324 = vmatprep.subr.bf16.mxu0 0
    %1325 = vmatpush1.bf16.msra.mxu0 0
    %1326 = vmatprep.subr.bf16.mxu0 0
    %1327 = vmatpush1.bf16.msra.mxu0 0
    %1328 = vmatprep.subr.bf16.mxu0 0
    %1329 = vmatpush1.bf16.msra.mxu0 0
    %1330 = vmatprep.subr.bf16.mxu0 0
    %1331 = vmatpush1.bf16.msra.mxu0 0
    %1332 = vmatprep.subr.bf16.mxu0 0
    %1333 = vmatpush1.bf16.msra.mxu0 0
    %1334 = vmatprep.subr.bf16.mxu0 0
    %1335 = vmatpush1.bf16.msra.mxu0 0
    %1336 = vmatprep.subr.bf16.mxu0 0
    %1337 = vmatpush1.bf16.msra.mxu0 0
    %1338 = vmatprep.subr.bf16.mxu0 0
    %1339 = vmatpush1.bf16.msra.mxu0 0
    %1340 = vmatprep.subr.bf16.mxu0 0
    %1341 = vmatpush1.bf16.msra.mxu0 0
    %1342 = vmatprep.subr.bf16.mxu0 0
    %1343 = vmatpush1.bf16.msra.mxu0 0
    %1344 = vmatprep.mubr.bf16.mxu0 0
    %1345 = vmatmul.mubr.bf16.gmra.mrb[0].mxu0 %v1310
    %v1346 = vpop.f32.mrb[0].mxu0
    %v1347 = vadd.f32 %v1283, %v1346
    %v1348 = vpop.f32.mrb[0].mxu0
    %v1349 = vpop.f32.mrb[0].mxu0
    %v1350 = vadd.f32 %v1283, %v1349
    %v1351 = vpop.f32.mrb[0].mxu0
    %1352 = vdwg.mxu0
    %v1353 = vadd.f32 %v1144, %v1347
    %v1354 = vadd.f32 %v1147, %v1350
    %v1355 = vadd.f32 %v1152, %v1347
    %v1356 = vadd.f32 %v1155, %v1350
    %v1357 = vadd.f32 %v1160, %v1347
    %v1358 = vadd.f32 %v1163, %v1350
    %v1359 = vadd.f32 %v1168, %v1347
    %v1360 = vadd.f32 %v1171, %v1350
    %v1361 = vadd.f32 %v1176, %v1347
    %v1362 = vadd.f32 %v1179, %v1350
    %v1363 = vadd.f32 %v1184, %v1347
    %v1364 = vadd.f32 %v1187, %v1350
    %v1365 = vadd.f32 %v1192, %v1347
    %v1366 = vadd.f32 %v1195, %v1350
    %v1367 = vadd.f32 %v1200, %v1347
    %v1368 = vadd.f32 %v1203, %v1350
    %v1369 = vadd.f32 %v1208, %v1347
    %v1370 = vadd.f32 %v1211, %v1350
    %v1371 = vadd.f32 %v1216, %v1347
    %v1372 = vadd.f32 %v1219, %v1350
    %v1373 = vadd.f32 %v1224, %v1347
    %v1374 = vadd.f32 %v1227, %v1350
    %v1375 = vadd.f32 %v1232, %v1347
    %v1376 = vadd.f32 %v1235, %v1350
    %v1377 = vadd.f32 %v1240, %v1347
    %v1378 = vadd.f32 %v1243, %v1350
    %v1379 = vadd.f32 %v1248, %v1347
    %v1380 = vadd.f32 %v1251, %v1350
    %v1381 = vadd.f32 %v1256, %v1347
    %v1382 = vadd.f32 %v1259, %v1350
    %v1383 = vadd.f32 %v1264, %v1347
    %v1384 = vadd.f32 %v1267, %v1350
    %v1385 = vmax.f32 %v1353, 0.0
    %v1386 = vmax.f32 %v1354, 0.0
    %v1387 = vmax.f32 %v1355, 0.0
    %v1388 = vmax.f32 %v1356, 0.0
    %v1389 = vmax.f32 %v1357, 0.0
    %v1390 = vmax.f32 %v1358, 0.0
    %v1391 = vmax.f32 %v1359, 0.0
    %v1392 = vmax.f32 %v1360, 0.0
    %v1393 = vmax.f32 %v1361, 0.0
    %v1394 = vmax.f32 %v1362, 0.0
    %v1395 = vmax.f32 %v1363, 0.0
    %v1396 = vmax.f32 %v1364, 0.0
    %v1397 = vmax.f32 %v1365, 0.0
    %v1398 = vmax.f32 %v1366, 0.0
    %v1399 = vmax.f32 %v1367, 0.0
    %v1400 = vmax.f32 %v1368, 0.0
    %v1401 = vmax.f32 %v1369, 0.0
    %v1402 = vmax.f32 %v1370, 0.0
    %v1403 = vmax.f32 %v1371, 0.0
    %v1404 = vmax.f32 %v1372, 0.0
    %v1405 = vmax.f32 %v1373, 0.0
    %v1406 = vmax.f32 %v1374, 0.0
    %v1407 = vmax.f32 %v1375, 0.0
    %v1408 = vmax.f32 %v1376, 0.0
    %v1409 = vmax.f32 %v1377, 0.0
    %v1410 = vmax.f32 %v1378, 0.0
    %v1411 = vmax.f32 %v1379, 0.0
    %v1412 = vmax.f32 %v1380, 0.0
    %v1413 = vmax.f32 %v1381, 0.0
    %v1414 = vmax.f32 %v1382, 0.0
    %v1415 = vmax.f32 %v1383, 0.0
    %v1416 = vmax.f32 %v1384, 0.0
    %v1417 = vpack.c.bf16 %v1386, %v1385
    %v1418 = vpack.c.bf16 %v1388, %v1387
    %v1419 = vpack.c.bf16 %v1390, %v1389
    %v1420 = vpack.c.bf16 %v1392, %v1391
    %v1421 = vpack.c.bf16 %v1394, %v1393
    %v1422 = vpack.c.bf16 %v1396, %v1395
    %v1423 = vpack.c.bf16 %v1398, %v1397
    %v1424 = vpack.c.bf16 %v1400, %v1399
    %v1425 = vpack.c.bf16 %v1402, %v1401
    %v1426 = vpack.c.bf16 %v1404, %v1403
    %v1427 = vpack.c.bf16 %v1406, %v1405
    %v1428 = vpack.c.bf16 %v1408, %v1407
    %v1429 = vpack.c.bf16 %v1410, %v1409
    %v1430 = vpack.c.bf16 %v1412, %v1411
    %v1431 = vpack.c.bf16 %v1414, %v1413
    %v1432 = vpack.c.bf16 %v1416, %v1415
    %v1433 = vld [vmem:[%s10] sm:$0xf]
    %v1434 = vld [vmem:[%s10 + $0x4] sm:$0xf]
    %v1435 = vld [vmem:[%s10 + $0x8] sm:$0xf]
    %v1436 = vld [vmem:[%s10 + $0xc] sm:$0xf]
    %v1437 = vld [vmem:[%s10 + $0x10] sm:$0xf]
    %v1438 = vld [vmem:[%s10 + $0x14] sm:$0xf]
    %v1439 = vld [vmem:[%s10 + $0x18] sm:$0xf]
    %v1440 = vld [vmem:[%s10 + $0x1c] sm:$0xf]
    %v1449 = vunpack.c.l.b16 %v1433
    %v1450 = vunpack.c.l.b16 %v1434
    %v1451 = vunpack.c.l.b16 %v1435
    %v1452 = vunpack.c.l.b16 %v1436
    %v1453 = vunpack.c.l.b16 %v1437
    %v1454 = vunpack.c.l.b16 %v1438
    %v1455 = vunpack.c.l.b16 %v1439
    %v1456 = vunpack.c.l.b16 %v1440
    %v1457 = vpack.c.b16 %v1450, %v1449
    %v1458 = vpack.c.b16 %v1452, %v1451
    %v1459 = vpack.c.b16 %v1454, %v1453
    %v1460 = vpack.c.b16 %v1456, %v1455
    %v1466 = vsel %vm980, %v1417, 0
    %v1469 = vsel %vm980, %v1418, 0
    %v1472 = vsel %vm980, %v1419, 0
    %v1475 = vsel %vm980, %v1420, 0
    %v1478 = vsel %vm980, %v1421, 0
    %v1481 = vsel %vm980, %v1422, 0
    %v1484 = vsel %vm980, %v1423, 0
    %v1487 = vsel %vm980, %v1424, 0
    %v1490 = vsel %vm980, %v1425, 0
    %v1493 = vsel %vm980, %v1426, 0
    %v1496 = vsel %vm980, %v1427, 0
    %v1499 = vsel %vm980, %v1428, 0
    %v1502 = vsel %vm980, %v1429, 0
    %v1505 = vsel %vm980, %v1430, 0
    %v1508 = vsel %vm980, %v1431, 0
    %v1511 = vsel %vm980, %v1432, 0
    %1513 = vmatprep.subr.bf16.mxu0 0
    %1514 = vmatpush1.bf16.msra.mxu0 %v1457
    %1515 = vmatprep.subr.bf16.mxu0 0
    %1516 = vmatpush1.bf16.msra.mxu0 %v1458
    %1517 = vmatprep.subr.bf16.mxu0 0
    %1518 = vmatpush1.bf16.msra.mxu0 %v1459
    %1519 = vmatprep.subr.bf16.mxu0 0
    %1520 = vmatpush1.bf16.msra.mxu0 %v1460
    %1521 = vmatprep.subr.bf16.mxu0 0
    %1522 = vmatpush1.bf16.msra.mxu0 0
    %1523 = vmatprep.subr.bf16.mxu0 0
    %1524 = vmatpush1.bf16.msra.mxu0 0
    %1525 = vmatprep.subr.bf16.mxu0 0
    %1526 = vmatpush1.bf16.msra.mxu0 0
    %1527 = vmatprep.subr.bf16.mxu0 0
    %1528 = vmatpush1.bf16.msra.mxu0 0
    %1529 = vmatprep.subr.bf16.mxu0 0
    %1530 = vmatpush1.bf16.msra.mxu0 0
    %1531 = vmatprep.subr.bf16.mxu0 0
    %1532 = vmatpush1.bf16.msra.mxu0 0
    %1533 = vmatprep.subr.bf16.mxu0 0
    %1534 = vmatpush1.bf16.msra.mxu0 0
    %1535 = vmatprep.subr.bf16.mxu0 0
    %1536 = vmatpush1.bf16.msra.mxu0 0
    %1537 = vmatprep.subr.bf16.mxu0 0
    %1538 = vmatpush1.bf16.msra.mxu0 0
    %1539 = vmatprep.subr.bf16.mxu0 0
    %1540 = vmatpush1.bf16.msra.mxu0 0
    %1541 = vmatprep.subr.bf16.mxu0 0
    %1542 = vmatpush1.bf16.msra.mxu0 0
    %1543 = vmatprep.subr.bf16.mxu0 0
    %1544 = vmatpush1.bf16.msra.mxu0 0
    %1545 = vmatprep.mubr.bf16.mxu0 0
    %1546 = vmatmul.mubr.bf16.gmra.mrb[0].mxu0 %v1466
    %v1547 = vpop.f32.mrb[0].mxu0
    %v1548 = vadd.f32 0.0, %v1547
    %v1549 = vpop.f32.mrb[0].mxu0
    %v1550 = vpop.f32.mrb[0].mxu0
    %v1551 = vadd.f32 0.0, %v1550
    %v1552 = vpop.f32.mrb[0].mxu0
    %1553 = vmatprep.mubr.bf16.mxu0 0
    %1554 = vmatmul.mubr.bf16.gmra.mrb[0].mxu0 %v1469
    %v1555 = vpop.f32.mrb[0].mxu0
    %v1556 = vadd.f32 0.0, %v1555
    %v1557 = vpop.f32.mrb[0].mxu0
    %v1558 = vpop.f32.mrb[0].mxu0
    %v1559 = vadd.f32 0.0, %v1558
    %v1560 = vpop.f32.mrb[0].mxu0
    %1561 = vmatprep.mubr.bf16.mxu0 0
    %1562 = vmatmul.mubr.bf16.gmra.mrb[0].mxu0 %v1472
    %v1563 = vpop.f32.mrb[0].mxu0
    %v1564 = vadd.f32 0.0, %v1563
    %v1565 = vpop.f32.mrb[0].mxu0
    %v1566 = vpop.f32.mrb[0].mxu0
    %v1567 = vadd.f32 0.0, %v1566
    %v1568 = vpop.f32.mrb[0].mxu0
    %1569 = vmatprep.mubr.bf16.mxu0 0
    %1570 = vmatmul.mubr.bf16.gmra.mrb[0].mxu0 %v1475
    %v1571 = vpop.f32.mrb[0].mxu0
    %v1572 = vadd.f32 0.0, %v1571
    %v1573 = vpop.f32.mrb[0].mxu0
    %v1574 = vpop.f32.mrb[0].mxu0
    %v1575 = vadd.f32 0.0, %v1574
    %v1576 = vpop.f32.mrb[0].mxu0
    %1577 = vmatprep.mubr.bf16.mxu0 0
    %1578 = vmatmul.mubr.bf16.gmra.mrb[0].mxu0 %v1478
    %v1579 = vpop.f32.mrb[0].mxu0
    %v1580 = vadd.f32 0.0, %v1579
    %v1581 = vpop.f32.mrb[0].mxu0
    %v1582 = vpop.f32.mrb[0].mxu0
    %v1583 = vadd.f32 0.0, %v1582
    %v1584 = vpop.f32.mrb[0].mxu0
    %1585 = vmatprep.mubr.bf16.mxu0 0
    %1586 = vmatmul.mubr.bf16.gmra.mrb[0].mxu0 %v1481
    %v1587 = vpop.f32.mrb[0].mxu0
    %v1588 = vadd.f32 0.0, %v1587
    %v1589 = vpop.f32.mrb[0].mxu0
    %v1590 = vpop.f32.mrb[0].mxu0
    %v1591 = vadd.f32 0.0, %v1590
    %v1592 = vpop.f32.mrb[0].mxu0
    %1593 = vmatprep.mubr.bf16.mxu0 0
    %1594 = vmatmul.mubr.bf16.gmra.mrb[0].mxu0 %v1484
    %v1595 = vpop.f32.mrb[0].mxu0
    %v1596 = vadd.f32 0.0, %v1595
    %v1597 = vpop.f32.mrb[0].mxu0
    %v1598 = vpop.f32.mrb[0].mxu0
    %v1599 = vadd.f32 0.0, %v1598
    %v1600 = vpop.f32.mrb[0].mxu0
    %1601 = vmatprep.mubr.bf16.mxu0 0
    %1602 = vmatmul.mubr.bf16.gmra.mrb[0].mxu0 %v1487
    %v1603 = vpop.f32.mrb[0].mxu0
    %v1604 = vadd.f32 0.0, %v1603
    %v1605 = vpop.f32.mrb[0].mxu0
    %v1606 = vpop.f32.mrb[0].mxu0
    %v1607 = vadd.f32 0.0, %v1606
    %v1608 = vpop.f32.mrb[0].mxu0
    %1609 = vmatprep.mubr.bf16.mxu0 0
    %1610 = vmatmul.mubr.bf16.gmra.mrb[0].mxu0 %v1490
    %v1611 = vpop.f32.mrb[0].mxu0
    %v1612 = vadd.f32 0.0, %v1611
    %v1613 = vpop.f32.mrb[0].mxu0
    %v1614 = vpop.f32.mrb[0].mxu0
    %v1615 = vadd.f32 0.0, %v1614
    %v1616 = vpop.f32.mrb[0].mxu0
    %1617 = vmatprep.mubr.bf16.mxu0 0
    %1618 = vmatmul.mubr.bf16.gmra.mrb[0].mxu0 %v1493
    %v1619 = vpop.f32.mrb[0].mxu0
    %v1620 = vadd.f32 0.0, %v1619
    %v1621 = vpop.f32.mrb[0].mxu0
    %v1622 = vpop.f32.mrb[0].mxu0
    %v1623 = vadd.f32 0.0, %v1622
    %v1624 = vpop.f32.mrb[0].mxu0
    %1625 = vmatprep.mubr.bf16.mxu0 0
    %1626 = vmatmul.mubr.bf16.gmra.mrb[0].mxu0 %v1496
    %v1627 = vpop.f32.mrb[0].mxu0
    %v1628 = vadd.f32 0.0, %v1627
    %v1629 = vpop.f32.mrb[0].mxu0
    %v1630 = vpop.f32.mrb[0].mxu0
    %v1631 = vadd.f32 0.0, %v1630
    %v1632 = vpop.f32.mrb[0].mxu0
    %1633 = vmatprep.mubr.bf16.mxu0 0
    %1634 = vmatmul.mubr.bf16.gmra.mrb[0].mxu0 %v1499
    %v1635 = vpop.f32.mrb[0].mxu0
    %v1636 = vadd.f32 0.0, %v1635
    %v1637 = vpop.f32.mrb[0].mxu0
    %v1638 = vpop.f32.mrb[0].mxu0
    %v1639 = vadd.f32 0.0, %v1638
    %v1640 = vpop.f32.mrb[0].mxu0
    %1641 = vmatprep.mubr.bf16.mxu0 0
    %1642 = vmatmul.mubr.bf16.gmra.mrb[0].mxu0 %v1502
    %v1643 = vpop.f32.mrb[0].mxu0
    %v1644 = vadd.f32 0.0, %v1643
    %v1645 = vpop.f32.mrb[0].mxu0
    %v1646 = vpop.f32.mrb[0].mxu0
    %v1647 = vadd.f32 0.0, %v1646
    %v1648 = vpop.f32.mrb[0].mxu0
    %1649 = vmatprep.mubr.bf16.mxu0 0
    %1650 = vmatmul.mubr.bf16.gmra.mrb[0].mxu0 %v1505
    %v1651 = vpop.f32.mrb[0].mxu0
    %v1652 = vadd.f32 0.0, %v1651
    %v1653 = vpop.f32.mrb[0].mxu0
    %v1654 = vpop.f32.mrb[0].mxu0
    %v1655 = vadd.f32 0.0, %v1654
    %v1656 = vpop.f32.mrb[0].mxu0
    %1657 = vmatprep.mubr.bf16.mxu0 0
    %1658 = vmatmul.mubr.bf16.gmra.mrb[0].mxu0 %v1508
    %v1659 = vpop.f32.mrb[0].mxu0
    %v1660 = vadd.f32 0.0, %v1659
    %v1661 = vpop.f32.mrb[0].mxu0
    %v1662 = vpop.f32.mrb[0].mxu0
    %v1663 = vadd.f32 0.0, %v1662
    %v1664 = vpop.f32.mrb[0].mxu0
    %1665 = vmatprep.mubr.bf16.mxu0 0
    %1666 = vmatmul.mubr.bf16.gmra.mrb[0].mxu0 %v1511
    %v1667 = vpop.f32.mrb[0].mxu0
    %v1668 = vadd.f32 0.0, %v1667
    %v1669 = vpop.f32.mrb[0].mxu0
    %v1670 = vpop.f32.mrb[0].mxu0
    %v1671 = vadd.f32 0.0, %v1670
    %v1672 = vpop.f32.mrb[0].mxu0
    %1673 = vdwg.mxu0
    %v1674 = vsel %vm980, %v1548, -inf
    %v1675 = vsel %vm980, %v1556, -inf
    %v1676 = vsel %vm980, %v1564, -inf
    %v1677 = vmax.f32 %v1674, %v1676
    %v1678 = vsel %vm980, %v1572, -inf
    %v1679 = vmax.f32 %v1675, %v1678
    %v1680 = vsel %vm980, %v1580, -inf
    %v1681 = vmax.f32 %v1677, %v1680
    %v1682 = vsel %vm980, %v1588, -inf
    %v1683 = vmax.f32 %v1679, %v1682
    %v1684 = vsel %vm980, %v1596, -inf
    %v1685 = vmax.f32 %v1681, %v1684
    %v1686 = vsel %vm980, %v1604, -inf
    %v1687 = vmax.f32 %v1683, %v1686
    %v1688 = vsel %vm980, %v1612, -inf
    %v1689 = vmax.f32 %v1685, %v1688
    %v1690 = vsel %vm980, %v1620, -inf
    %v1691 = vmax.f32 %v1687, %v1690
    %v1692 = vsel %vm980, %v1628, -inf
    %v1693 = vmax.f32 %v1689, %v1692
    %v1694 = vsel %vm980, %v1636, -inf
    %v1695 = vmax.f32 %v1691, %v1694
    %v1696 = vsel %vm980, %v1644, -inf
    %v1697 = vmax.f32 %v1693, %v1696
    %v1698 = vsel %vm980, %v1652, -inf
    %v1699 = vmax.f32 %v1695, %v1698
    %v1700 = vsel %vm980, %v1660, -inf
    %v1701 = vmax.f32 %v1697, %v1700
    %v1702 = vsel %vm980, %v1668, -inf
    %v1703 = vmax.f32 %v1699, %v1702
    %v1704 = vmax.f32 %v1701, %v1703
    %v1705 = vsel %vm980, %v1551, -inf
    %v1706 = vsel %vm980, %v1559, -inf
    %v1707 = vsel %vm980, %v1567, -inf
    %v1708 = vmax.f32 %v1705, %v1707
    %v1709 = vsel %vm980, %v1575, -inf
    %v1710 = vmax.f32 %v1706, %v1709
    %v1711 = vsel %vm980, %v1583, -inf
    %v1712 = vmax.f32 %v1708, %v1711
    %v1713 = vsel %vm980, %v1591, -inf
    %v1714 = vmax.f32 %v1710, %v1713
    %v1715 = vsel %vm980, %v1599, -inf
    %v1716 = vmax.f32 %v1712, %v1715
    %v1717 = vsel %vm980, %v1607, -inf
    %v1718 = vmax.f32 %v1714, %v1717
    %v1719 = vsel %vm980, %v1615, -inf
    %v1720 = vmax.f32 %v1716, %v1719
    %v1721 = vsel %vm980, %v1623, -inf
    %v1722 = vmax.f32 %v1718, %v1721
    %v1723 = vsel %vm980, %v1631, -inf
    %v1724 = vmax.f32 %v1720, %v1723
    %v1725 = vsel %vm980, %v1639, -inf
    %v1726 = vmax.f32 %v1722, %v1725
    %v1727 = vsel %vm980, %v1647, -inf
    %v1728 = vmax.f32 %v1724, %v1727
    %v1729 = vsel %vm980, %v1655, -inf
    %v1730 = vmax.f32 %v1726, %v1729
    %v1731 = vsel %vm980, %v1663, -inf
    %v1732 = vmax.f32 %v1728, %v1731
    %v1733 = vsel %vm980, %v1671, -inf
    %v1734 = vmax.f32 %v1730, %v1733
    %v1735 = vmax.f32 %v1732, %v1734
    %v1736 = vld [vmem:[%s11] sm:$0x1]
    %v1738 = vlaneseq
    %v1739 = vshrl.u32 %v1738, 7
    %v1740 = vsub.s32 0, %v1739
    %v1741 = vrot.slane %v1736, %v1740
    %v1743 = vadd.f32 %v1704, %v1741
    %v1744 = vadd.f32 %v1735, %v1741
    %v1745 = vmul.f32 %v1743, %v1743
    %v1746 = vmul.f32 %v1744, %v1744
    %v1747 = vsel %vm980, %v1745, 0.0
    %1748 = vadd.xlane.f32.xlu0 %v1747
    %v1749 = vpop.xlane.xlu0 %1748
    %v1750 = vsel %vm980, %v1746, 0.0
    %1751 = vadd.xlane.f32.xlu0 %v1750
    %v1752 = vpop.xlane.xlu0 %1751
    %v1753 = vrsqrt.pop %v1749
    %v1754 = vmul.f32 %v1749, %v1753
    %vm1755 = vcmp.eq.f32.partialorder %v1749, inf
    %v1756 = vsel %vm1755, %v1749, %v1754
    %vm1757 = vcmp.eq.f32.partialorder %v1749, 0.0
    %v1758 = vand.u32 %v1749, 2147483648
    %v1759 = vsel %vm1757, %v1758, %v1756
    %v1760 = vrsqrt.pop %v1752
    %v1761 = vmul.f32 %v1752, %v1760
    %vm1762 = vcmp.eq.f32.partialorder %v1752, inf
    %v1763 = vsel %vm1762, %v1752, %v1761
    %vm1764 = vcmp.eq.f32.partialorder %v1752, 0.0
    %v1765 = vand.u32 %v1752, 2147483648
    %v1766 = vsel %vm1764, %v1765, %v1763
    %v1767 = vadd.f32 %v1759, 1e-05
    %v1768 = vadd.f32 %v1766, 1e-05
    %v1769 = vrcp.pop %v1767
    %v1770 = vmul.f32 %v1743, %v1769
    %v1771 = vrcp.pop %v1768
    %v1772 = vmul.f32 %v1744, %v1771
    %1773 = vst.msk [vmem:[#allocation2] sm:$0xff] %vm980, %v1770
    %1774 = vst.msk [vmem:[#allocation2 + $0x8] sm:$0xff] %vm980, %v1772
    // Predicated region
    $region50: #{tpu_custom_call.1} parent=1 // pred_check
      _
    $region51: #{tpu_custom_call.1} parent=1 // pred_check_branch
      %1776 = sbr.rel (0) target = $region53
    $region52: #{tpu_custom_call.1} parent=1 // pred_region
      %s1778 = ssub.s32 256, 256
      %1779 = vsyncadd [#allocation3], %s1778
      %s1780 = sshll.u32 [#allocation2], 4
      %s1781 = int_to_ptr.vmem [resolvable:$true] %s1780
      %1786 = dma.vmem_to_hbm [thread:$0]  %s1781, 256, %s12, [#allocation3], 128, 128, 8
    $region53: #{tpu_custom_call.1} parent=1 // pred_fallthru
      _
    // Predicated region
    $region54: #{tpu_custom_call.1} parent=1 // pred_check
      _
    $region55: #{tpu_custom_call.1} parent=1 // pred_check_branch
      %1788 = sbr.rel (0) target = $region57
    $region56: #{tpu_custom_call.1} parent=1 // pred_region
      %1789 = dma.done [#allocation3], 256
    $region57: #{tpu_custom_call.1} parent=1 // pred_fallthru
      _
    %1790 = vsyncpa [#allocation3], 1

</llo_original>
